<compile_context>
chip_gen: v5e
topology: v5e:2x2
jax: 0.10.0
libtpu: 0.0.40
codegen_flags: <defaults>
</compile_context>

<pallas_src>
import jax
import jax.numpy as jnp
from jax import lax
from jax.experimental import pallas as pl
from jax.experimental.pallas import tpu as pltpu

# ---------------- configuration (small demo sizes) ----------------
INPUT_CHANNELS = 4
HIDDEN = 64
NUM_HEADS = 8                      # module default
HEAD_DIM = HIDDEN // NUM_HEADS     # 8
OUTPUT_CHANNELS = 3
FF_DIM = 4 * HIDDEN                # trafo_ff_dim default
SEQ_LEN = 8                        # number of observation times L
BATCH = 2
LN_EPS = 1e-5                      # torch.nn.LayerNorm default


# ---------------- in-kernel helpers ----------------
def _layer_norm(x, gamma, beta):
    mu = jnp.mean(x, axis=-1, keepdims=True)
    var = jnp.mean(jnp.square(x - mu), axis=-1, keepdims=True)
    return (x - mu) * lax.rsqrt(var + LN_EPS) * gamma + beta


# ---------------- fused kernel: one batch element per grid step ----------------
def cde_fused_kernel(h_ref, coef_ref, bd_ref,
                     ln_g_ref, ln_b_ref,
                     w_kvqb_ref, b_kvqb_ref,
                     w_o_ref, b_o_ref,
                     ff_ln_g_ref, ff_ln_b_ref,
                     w_ff1_ref, b_ff1_ref, w_ff2_ref, b_ff2_ref,
                     w_lin_ref, b_lin_ref,
                     y_ref):
    # h_ref   : (1, R, H)  R = 4*(L-1) RK4-node rows + 1 query row (this batch)
    # coef_ref: (1, R, 1)  quadrature weight * segment selection + z0 one-hot
    # bd_ref  : (H, H)     block-diagonal ones (per-head pooling matrix)
    H = w_o_ref.shape[0]
    h = h_ref[0]                                   # (R, H) f32
    R = h.shape[0]
    coef = coef_ref[0]                             # (R, 1) f32
    bd = bd_ref[...]                               # (H, H) f32

    # LayerNorm(input_proj(dX/dt)) — input_proj already folded into the wrapper.
    hn = _layer_norm(h, ln_g_ref[...], ln_b_ref[...])

    # Fused [k | v | q | beta-per-lane] projection: one lane-dense bf16 matmul,
    # 256 output lanes, f32 accumulation.
    kvqb = jnp.dot(hn.astype(jnp.bfloat16), w_kvqb_ref[...],
                   preferred_element_type=jnp.float32) + b_kvqb_ref[...]
    k = kvqb[:, 0 * H:1 * H]
    v = kvqb[:, 1 * H:2 * H]
    qc = kvqb[:, 2 * H:3 * H]
    bet = kvqb[:, 3 * H:4 * H]       # beta already broadcast across each head's lanes

    # Per-head softmax(k), fully lane-dense: row-wide max shift (mathematically
    # identical), per-head denominators via an MXU block-diagonal pooling matmul.
    ek = jnp.exp(k - jnp.max(k, axis=-1, keepdims=True))
    ksm = ek / jnp.dot(ek, bd, preferred_element_type=jnp.float32)

    # Query softmax (last row = dX/dt(times[-1]) path, as in the reference).
    qrow = qc[R - 1:R, :]
    eq = jnp.exp(qrow - jnp.max(qrow, axis=-1, keepdims=True))
    qsm = eq / jnp.dot(eq, bd, preferred_element_type=jnp.float32)     # (1, H)

    # Per-head <softmax(k), qs>, broadcast back over each head's lanes (MXU pool).
    dot_b = jnp.dot(ksm * qsm, bd, preferred_element_type=jnp.float32)  # (R, H)

    # W^T q retrieval without materializing the fast weight:
    #   out_j = sum_rows coef * sigmoid(beta) * <softmax(k), q> * tanh(v)_j
    s = coef * jax.nn.sigmoid(bet) * dot_b                               # (R, H)
    out = jnp.sum(s * jnp.tanh(v), axis=0, keepdims=True)                # (1, H)

    # out_proj
    out = jnp.dot(out.astype(jnp.bfloat16), w_o_ref[...],
                  preferred_element_type=jnp.float32) + b_o_ref[...]

    # TransformerFFlayers: x + W2 @ ReLU(W1 @ LayerNorm(x))  (dropout = 0)
    ff = _layer_norm(out, ff_ln_g_ref[...], ff_ln_b_ref[...])
    ff = jnp.maximum(
        jnp.dot(ff.astype(jnp.bfloat16), w_ff1_ref[...],
                preferred_element_type=jnp.float32) + b_ff1_ref[...], 0.0)
    ff = jnp.dot(ff.astype(jnp.bfloat16), w_ff2_ref[...],
                 preferred_element_type=jnp.float32) + b_ff2_ref[...]
    out = out + ff

    # final linear head
    y_ref[0] = jnp.dot(out, w_lin_ref[...],
                       preferred_element_type=jnp.float32) + b_lin_ref[...]


# ---------------- wrapper (glue in plain JAX) ----------------
@jax.jit
def fast_weight_cde_v3_forward(times, coeffs, final_index, params):
    a, b, two_c, three_d = coeffs                     # each (B, L-1, Cin)
    bsz, lm1, _ = b.shape
    del a  # TODO(synk): X(t) is not consumed by the reconstructed Hebb vector field

    H = HIDDEN
    dt = jnp.min(times[1:] - times[:-1]).astype(jnp.float32)   # rk4 step_size

    # --- fold input_proj (affine) into the spline pre-pass ---
    w_in, b_in = params["w_in"], params["b_in"]
    hb = b.astype(jnp.float32) @ w_in         # (B, L-1, H)
    hc = two_c.astype(jnp.float32) @ w_in
    hd = three_d.astype(jnp.float32) @ w_in

    # RK4 3/8-rule nodes of every segment; rows ordered (batch, stage, segment).
    fr = (dt * jnp.array([0.0, 1.0 / 3.0, 2.0 / 3.0, 1.0], jnp.float32))[:, None, None, None]
    h_stages = hb[None] + (hc[None] + hd[None] * fr) * fr + b_in        # (4, B, L-1, H)
    h_stages = jnp.transpose(h_stages, (1, 0, 2, 3)).reshape(bsz, 4 * lm1, H)

    # query row: input_proj(dX/dt(times[-1]))
    frac_last = (times[-1] - times[-2]).astype(jnp.float32)
    h_query = hb[:, -1] + (hc[:, -1] + hd[:, -1] * frac_last) * frac_last + b_in  # (B, H)
    h_all = jnp.concatenate([h_stages, h_query[:, None, :]], axis=1)    # (B, R, H)
    R = 4 * lm1 + 1

    # --- per-row quadrature coefficient * segment selection + z0 one-hot ---
    base = (dt / 8.0) * jnp.array([1.0, 3.0, 3.0, 1.0], jnp.float32)    # per RK4 stage
    base_rows = jnp.repeat(base, lm1)                                   # row = stage*lm1+seg
    seg_rows = jnp.tile(jnp.arange(lm1, dtype=jnp.int32), 4)
    z0_rows = (jnp.arange(4 * lm1) == 0).astype(jnp.float32)            # z0 = field(t0)
    sel = (seg_rows[None, :] < final_index.astype(jnp.int32)[:, None]).astype(jnp.float32)
    coef = base_rows[None, :] * sel + z0_rows[None, :]                  # (B, 4*(L-1))
    coef = jnp.concatenate([coef, jnp.zeros((bsz, 1), jnp.float32)], axis=1)  # query row: 0
    coef = coef[:, :, None]                                             # (B, R, 1)

    # --- block-diagonal per-head pooling matrix ---
    li = jnp.arange(H, dtype=jnp.int32)
    bd = (li[:, None] // HEAD_DIM == li[None, :] // HEAD_DIM).astype(jnp.float32)

    # --- fused [k | v | q | beta-expanded] projection weights (bf16 storage) ---
    w_beta_exp = jnp.repeat(params["w_beta"], HEAD_DIM, axis=1)         # (H, H)
    b_beta_exp = jnp.repeat(params["b_beta"], HEAD_DIM, axis=1)         # (1, H)
    w_kvqb = jnp.concatenate(
        [params["w_k"], params["w_v"], params["w_q"], w_beta_exp], axis=1).astype(jnp.bfloat16)
    b_kvqb = jnp.concatenate(
        [params["b_k"], params["b_v"], params["b_q"], b_beta_exp], axis=1)     # f32

    w_o = params["w_o"].astype(jnp.bfloat16)
    w_ff1 = params["w_ff1"].astype(jnp.bfloat16)
    w_ff2 = params["w_ff2"].astype(jnp.bfloat16)

    # --- advisory cost estimate for the XLA scheduler ---
    flops = bsz * (2 * R * H * 4 * H            # fused kvqb projection
                   + 2 * 2 * R * H * H          # two block-diag head pools
                   + 2 * H * H                  # query pool (R=1) + out_proj
                   + 2 * H * H
                   + 2 * 2 * H * FF_DIM         # FF block
                   + 2 * H * OUTPUT_CHANNELS)
    transcendentals = bsz * (3 * R * H + H)
    bytes_accessed = int(
        h_all.size * 4 + coef.size * 4 + bd.size * 4
        + (w_kvqb.size + w_o.size + w_ff1.size + w_ff2.size) * 2
        + (b_kvqb.size + params["b_o"].size + params["b_ff1"].size + params["b_ff2"].size
           + params["w_lin"].size + params["b_lin"].size
           + params["ln_g"].size + params["ln_b"].size
           + params["ff_ln_g"].size + params["ff_ln_b"].size) * 4
        + bsz * OUTPUT_CHANNELS * 4)

    def resident(shape):                       # weights: constant index map -> stay resident
        return pl.BlockSpec(shape, lambda bb: (0,) * len(shape))

    def per_batch(shape):                      # per-batch slabs
        return pl.BlockSpec(shape, lambda bb: (bb,) + (0,) * (len(shape) - 1))

    pred = pl.pallas_call(
        cde_fused_kernel,
        out_shape=jax.ShapeDtypeStruct((bsz, 1, OUTPUT_CHANNELS), jnp.float32),
        grid=(bsz,),
        in_specs=[
            per_batch((1, R, H)),                        # h_all
            per_batch((1, R, 1)),                        # coef
            resident((H, H)),                            # block-diag head pool
            resident((1, H)), resident((1, H)),          # input LayerNorm gamma/beta
            resident((H, 4 * H)), resident((1, 4 * H)),  # fused kvqb projection
            resident((H, H)), resident((1, H)),          # out_proj
            resident((1, H)), resident((1, H)),          # ff LayerNorm gamma/beta
            resident((H, FF_DIM)), resident((1, FF_DIM)),    # ff linear 1
            resident((FF_DIM, H)), resident((1, H)),         # ff linear 2
            resident((H, OUTPUT_CHANNELS)), resident((1, OUTPUT_CHANNELS)),  # final head
        ],
        out_specs=per_batch((1, 1, OUTPUT_CHANNELS)),
        compiler_params=pltpu.CompilerParams(
            dimension_semantics=("parallel",),           # v7x: one batch per TensorCore
            vmem_limit_bytes=32 * 1024 * 1024),
        cost_estimate=pl.CostEstimate(flops=flops, transcendentals=transcendentals,
                                      bytes_accessed=bytes_accessed),
    )(h_all, coef, bd,
      params["ln_g"], params["ln_b"],
      w_kvqb, b_kvqb,
      w_o, params["b_o"],
      params["ff_ln_g"], params["ff_ln_b"],
      w_ff1, params["b_ff1"], w_ff2, params["b_ff2"],
      params["w_lin"], params["b_lin"])
    return pred.reshape(bsz, OUTPUT_CHANNELS)


# ---------------- deterministic parameter initialization ----------------
def init_params(key):
    def linear(k, fan_in, fan_out):
        bound = 1.0 / (fan_in ** 0.5)
        kw, kb = jax.random.split(k)
        w = jax.random.uniform(kw, (fan_in, fan_out), jnp.float32, -bound, bound)
        b = jax.random.uniform(kb, (1, fan_out), jnp.float32, -bound, bound)
        return w, b

    ks = jax.random.split(key, 10)
    p = {}
    p["w_in"], p["b_in"] = linear(ks[0], INPUT_CHANNELS, HIDDEN)      # update_net.input_proj
    p["ln_g"] = jnp.ones((1, HIDDEN), jnp.float32)                    # update_net.input_layer_norm
    p["ln_b"] = jnp.zeros((1, HIDDEN), jnp.float32)
    p["w_k"], p["b_k"] = linear(ks[1], HIDDEN, HIDDEN)                # Hebb key proj
    p["w_v"], p["b_v"] = linear(ks[2], HIDDEN, HIDDEN)                # Hebb value proj
    p["w_beta"], p["b_beta"] = linear(ks[3], HIDDEN, NUM_HEADS)       # Hebb learning-rate proj
    p["w_q"], p["b_q"] = linear(ks[4], HIDDEN, HIDDEN)                # query_net
    p["w_o"], p["b_o"] = linear(ks[5], HIDDEN, HIDDEN)                # out_proj
    p["ff_ln_g"] = jnp.ones((1, HIDDEN), jnp.float32)                 # ff_block layer_norm
    p["ff_ln_b"] = jnp.zeros((1, HIDDEN), jnp.float32)
    p["w_ff1"], p["b_ff1"] = linear(ks[6], HIDDEN, FF_DIM)            # ff_block linear 1
    p["w_ff2"], p["b_ff2"] = linear(ks[7], FF_DIM, HIDDEN)            # ff_block linear 2
    p["w_lin"], p["b_lin"] = linear(ks[8], HIDDEN, OUTPUT_CHANNELS)   # final linear
    return p


if __name__ == "__main__":
    key = jax.random.PRNGKey(0)
    k_params, k_data = jax.random.split(key)
    params = init_params(k_params)

    L = SEQ_LEN
    times = jnp.linspace(0.0, 1.0, L).astype(jnp.float32)
    ka, kb_, kc_, kd = jax.random.split(k_data, 4)
    cshape = (BATCH, L - 1, INPUT_CHANNELS)
    coeffs = (jax.random.normal(ka, cshape, jnp.float32),   # a
              jax.random.normal(kb_, cshape, jnp.float32),  # b
              jax.random.normal(kc_, cshape, jnp.float32),  # two_c
              jax.random.normal(kd, cshape, jnp.float32))   # three_d
    final_index = jnp.array([L - 1, L - 2], dtype=jnp.int32)

    pred_y = fast_weight_cde_v3_forward(times, coeffs, final_index, params)
    pred_y = jax.block_until_ready(pred_y)
    assert pred_y.shape == (BATCH, OUTPUT_CHANNELS)
    assert bool(jnp.all(jnp.isfinite(pred_y)))
    print("KERNEL_OK")
</pallas_src>

<mosaic_0001>
module attributes {stable_mosaic.version = 11 : i64} {
  func.func @cde_fused_kernel(%arg0: i32, %arg1: memref<1x29x64xf32, #tpu.memory_space<vmem>>, %arg2: memref<1x29x1xf32, #tpu.memory_space<vmem>>, %arg3: memref<64x64xf32, #tpu.memory_space<vmem>>, %arg4: memref<1x64xf32, #tpu.memory_space<vmem>>, %arg5: memref<1x64xf32, #tpu.memory_space<vmem>>, %arg6: memref<64x256xbf16, #tpu.memory_space<vmem>>, %arg7: memref<1x256xf32, #tpu.memory_space<vmem>>, %arg8: memref<64x64xbf16, #tpu.memory_space<vmem>>, %arg9: memref<1x64xf32, #tpu.memory_space<vmem>>, %arg10: memref<1x64xf32, #tpu.memory_space<vmem>>, %arg11: memref<1x64xf32, #tpu.memory_space<vmem>>, %arg12: memref<64x256xbf16, #tpu.memory_space<vmem>>, %arg13: memref<1x256xf32, #tpu.memory_space<vmem>>, %arg14: memref<256x64xbf16, #tpu.memory_space<vmem>>, %arg15: memref<1x64xf32, #tpu.memory_space<vmem>>, %arg16: memref<64x3xf32, #tpu.memory_space<vmem>>, %arg17: memref<1x3xf32, #tpu.memory_space<vmem>>, %arg18: memref<1x1x3xf32, #tpu.memory_space<vmem>>) attributes {dimension_semantics = [#tpu.dimension_semantics<parallel>], iteration_bounds = array<i64: 2>, scalar_prefetch = 0 : i64, scratch_operands = 0 : i64, tpu.core_type = #tpu.core_type<tc>, window_params = [{transform_indices = @transform_0, window_bounds = array<i64: 1, 29, 64>}, {transform_indices = @transform_1, window_bounds = array<i64: 1, 29, 1>}, {pipeline_mode = #tpu.pipeline_mode<synchronous>, transform_indices = @transform_2, window_bounds = array<i64: 64, 64>}, {pipeline_mode = #tpu.pipeline_mode<synchronous>, transform_indices = @transform_3, window_bounds = array<i64: 1, 64>}, {pipeline_mode = #tpu.pipeline_mode<synchronous>, transform_indices = @transform_4, window_bounds = array<i64: 1, 64>}, {pipeline_mode = #tpu.pipeline_mode<synchronous>, transform_indices = @transform_5, window_bounds = array<i64: 64, 256>}, {pipeline_mode = #tpu.pipeline_mode<synchronous>, transform_indices = @transform_6, window_bounds = array<i64: 1, 256>}, {pipeline_mode = #tpu.pipeline_mode<synchronous>, transform_indices = @transform_7, window_bounds = array<i64: 64, 64>}, {pipeline_mode = #tpu.pipeline_mode<synchronous>, transform_indices = @transform_8, window_bounds = array<i64: 1, 64>}, {pipeline_mode = #tpu.pipeline_mode<synchronous>, transform_indices = @transform_9, window_bounds = array<i64: 1, 64>}, {pipeline_mode = #tpu.pipeline_mode<synchronous>, transform_indices = @transform_10, window_bounds = array<i64: 1, 64>}, {pipeline_mode = #tpu.pipeline_mode<synchronous>, transform_indices = @transform_11, window_bounds = array<i64: 64, 256>}, {pipeline_mode = #tpu.pipeline_mode<synchronous>, transform_indices = @transform_12, window_bounds = array<i64: 1, 256>}, {pipeline_mode = #tpu.pipeline_mode<synchronous>, transform_indices = @transform_13, window_bounds = array<i64: 256, 64>}, {pipeline_mode = #tpu.pipeline_mode<synchronous>, transform_indices = @transform_14, window_bounds = array<i64: 1, 64>}, {pipeline_mode = #tpu.pipeline_mode<synchronous>, transform_indices = @transform_15, window_bounds = array<i64: 64, 3>}, {pipeline_mode = #tpu.pipeline_mode<synchronous>, transform_indices = @transform_16, window_bounds = array<i64: 1, 3>}, {transform_indices = @transform_17, window_bounds = array<i64: 1, 1, 3>}]} {
    %c0 = arith.constant 0 : index
    %c0_0 = arith.constant 0 : index
    %c0_1 = arith.constant 0 : index
    %0 = vector.load %arg1[%c0, %c0_0, %c0_1] : memref<1x29x64xf32, #tpu.memory_space<vmem>>, vector<1x29x64xf32>
    %1 = vector.shape_cast %0 : vector<1x29x64xf32> to vector<29x64xf32>
    %c0_2 = arith.constant 0 : index
    %c0_3 = arith.constant 0 : index
    %c0_4 = arith.constant 0 : index
    %2 = vector.load %arg2[%c0_2, %c0_3, %c0_4] : memref<1x29x1xf32, #tpu.memory_space<vmem>>, vector<1x29x1xf32>
    %3 = vector.shape_cast %2 : vector<1x29x1xf32> to vector<29x1xf32>
    %c0_5 = arith.constant 0 : index
    %c0_6 = arith.constant 0 : index
    %4 = vector.load %arg3[%c0_5, %c0_6] : memref<64x64xf32, #tpu.memory_space<vmem>>, vector<64x64xf32>
    %c0_7 = arith.constant 0 : index
    %c0_8 = arith.constant 0 : index
    %5 = vector.load %arg4[%c0_7, %c0_8] : memref<1x64xf32, #tpu.memory_space<vmem>>, vector<1x64xf32>
    %c0_9 = arith.constant 0 : index
    %c0_10 = arith.constant 0 : index
    %6 = vector.load %arg5[%c0_9, %c0_10] : memref<1x64xf32, #tpu.memory_space<vmem>>, vector<1x64xf32>
    %cst = arith.constant dense<0.000000e+00> : vector<29xf32>
    %7 = vector.multi_reduction <add>, %1, %cst [1] : vector<29x64xf32> to vector<29xf32>
    %8 = vector.shape_cast %7 : vector<29xf32> to vector<29x1xf32>
    %cst_11 = arith.constant 6.400000e+01 : f32
    %9 = vector.broadcast %cst_11 : f32 to vector<29x1xf32>
    %10 = arith.divf %8, %9 : vector<29x1xf32>
    %11 = vector.broadcast %10 : vector<29x1xf32> to vector<29x64xf32>
    %12 = arith.subf %1, %11 : vector<29x64xf32>
    %13 = arith.mulf %12, %12 : vector<29x64xf32>
    %cst_12 = arith.constant dense<0.000000e+00> : vector<29xf32>
    %14 = vector.multi_reduction <add>, %13, %cst_12 [1] : vector<29x64xf32> to vector<29xf32>
    %15 = vector.shape_cast %14 : vector<29xf32> to vector<29x1xf32>
    %cst_13 = arith.constant 6.400000e+01 : f32
    %16 = vector.broadcast %cst_13 : f32 to vector<29x1xf32>
    %17 = arith.divf %15, %16 : vector<29x1xf32>
    %18 = vector.broadcast %10 : vector<29x1xf32> to vector<29x64xf32>
    %19 = arith.subf %1, %18 : vector<29x64xf32>
    %cst_14 = arith.constant 9.99999974E-6 : f32
    %20 = vector.broadcast %cst_14 : f32 to vector<29x1xf32>
    %21 = arith.addf %17, %20 : vector<29x1xf32>
    %22 = math.rsqrt %21 : vector<29x1xf32>
    %23 = vector.broadcast %22 : vector<29x1xf32> to vector<29x64xf32>
    %24 = arith.mulf %19, %23 : vector<29x64xf32>
    %25 = vector.broadcast %5 : vector<1x64xf32> to vector<29x64xf32>
    %26 = arith.mulf %24, %25 : vector<29x64xf32>
    %27 = vector.broadcast %6 : vector<1x64xf32> to vector<29x64xf32>
    %28 = arith.addf %26, %27 : vector<29x64xf32>
    %29 = arith.truncf %28 : vector<29x64xf32> to vector<29x64xbf16>
    %c0_15 = arith.constant 0 : index
    %c0_16 = arith.constant 0 : index
    %30 = vector.load %arg6[%c0_15, %c0_16] : memref<64x256xbf16, #tpu.memory_space<vmem>>, vector<64x256xbf16>
    %cst_17 = arith.constant dense<0.000000e+00> : vector<29x256xf32>
    %31 = tpu.matmul %29, %30, %cst_17 {dimension_numbers = #tpu.dot_dimension_numbers<[1], [0], [0], [1], [0, 0, 1, 1], [], []>} : vector<29x64xbf16>, vector<64x256xbf16>, vector<29x256xf32> -> vector<29x256xf32>
    %c0_18 = arith.constant 0 : index
    %c0_19 = arith.constant 0 : index
    %32 = vector.load %arg7[%c0_18, %c0_19] : memref<1x256xf32, #tpu.memory_space<vmem>>, vector<1x256xf32>
    %33 = vector.broadcast %32 : vector<1x256xf32> to vector<29x256xf32>
    %34 = arith.addf %31, %33 : vector<29x256xf32>
    %35 = vector.extract_strided_slice %34 {offsets = [0, 0], sizes = [29, 64], strides = [1, 1]} : vector<29x256xf32> to vector<29x64xf32>
    %36 = vector.extract_strided_slice %34 {offsets = [0, 64], sizes = [29, 64], strides = [1, 1]} : vector<29x256xf32> to vector<29x64xf32>
    %37 = vector.extract_strided_slice %34 {offsets = [0, 128], sizes = [29, 64], strides = [1, 1]} : vector<29x256xf32> to vector<29x64xf32>
    %38 = vector.extract_strided_slice %34 {offsets = [0, 192], sizes = [29, 64], strides = [1, 1]} : vector<29x256xf32> to vector<29x64xf32>
    %cst_20 = arith.constant dense<0xFF800000> : vector<29xf32>
    %39 = vector.multi_reduction <maximumf>, %35, %cst_20 [1] : vector<29x64xf32> to vector<29xf32>
    %40 = vector.shape_cast %39 : vector<29xf32> to vector<29x1xf32>
    %41 = vector.broadcast %40 : vector<29x1xf32> to vector<29x64xf32>
    %42 = arith.subf %35, %41 : vector<29x64xf32>
    %43 = math.exp %42 : vector<29x64xf32>
    %cst_21 = arith.constant dense<0.000000e+00> : vector<29x64xf32>
    %44 = tpu.matmul %43, %4, %cst_21 {dimension_numbers = #tpu.dot_dimension_numbers<[1], [0], [0], [1], [0, 0, 1, 1], [], []>} : vector<29x64xf32>, vector<64x64xf32>, vector<29x64xf32> -> vector<29x64xf32>
    %45 = arith.divf %43, %44 : vector<29x64xf32>
    %46 = vector.extract_strided_slice %37 {offsets = [28, 0], sizes = [1, 64], strides = [1, 1]} : vector<29x64xf32> to vector<1x64xf32>
    %cst_22 = arith.constant dense<0xFF800000> : vector<1xf32>
    %47 = vector.multi_reduction <maximumf>, %46, %cst_22 [1] : vector<1x64xf32> to vector<1xf32>
    %48 = vector.shape_cast %47 : vector<1xf32> to vector<1x1xf32>
    %49 = vector.broadcast %48 : vector<1x1xf32> to vector<1x64xf32>
    %50 = arith.subf %46, %49 : vector<1x64xf32>
    %51 = math.exp %50 : vector<1x64xf32>
    %cst_23 = arith.constant dense<0.000000e+00> : vector<1x64xf32>
    %52 = tpu.matmul %51, %4, %cst_23 {dimension_numbers = #tpu.dot_dimension_numbers<[1], [0], [0], [1], [0, 0, 1, 1], [], []>} : vector<1x64xf32>, vector<64x64xf32>, vector<1x64xf32> -> vector<1x64xf32>
    %53 = arith.divf %51, %52 : vector<1x64xf32>
    %54 = vector.broadcast %53 : vector<1x64xf32> to vector<29x64xf32>
    %55 = arith.mulf %45, %54 : vector<29x64xf32>
    %cst_24 = arith.constant dense<0.000000e+00> : vector<29x64xf32>
    %56 = tpu.matmul %55, %4, %cst_24 {dimension_numbers = #tpu.dot_dimension_numbers<[1], [0], [0], [1], [0, 0, 1, 1], [], []>} : vector<29x64xf32>, vector<64x64xf32>, vector<29x64xf32> -> vector<29x64xf32>
    %57 = arith.negf %38 : vector<29x64xf32>
    %58 = math.exp %57 : vector<29x64xf32>
    %cst_25 = arith.constant 1.000000e+00 : f32
    %59 = vector.broadcast %cst_25 : f32 to vector<29x64xf32>
    %60 = arith.addf %59, %58 : vector<29x64xf32>
    %61 = arith.divf %59, %60 : vector<29x64xf32>
    %62 = vector.broadcast %3 : vector<29x1xf32> to vector<29x64xf32>
    %63 = arith.mulf %62, %61 : vector<29x64xf32>
    %64 = arith.mulf %63, %56 : vector<29x64xf32>
    %65 = math.tanh %36 : vector<29x64xf32>
    %66 = arith.mulf %64, %65 : vector<29x64xf32>
    %cst_26 = arith.constant dense<0.000000e+00> : vector<64xf32>
    %67 = vector.multi_reduction <add>, %66, %cst_26 [0] : vector<29x64xf32> to vector<64xf32>
    %68 = vector.shape_cast %67 : vector<64xf32> to vector<1x64xf32>
    %69 = arith.truncf %68 : vector<1x64xf32> to vector<1x64xbf16>
    %c0_27 = arith.constant 0 : index
    %c0_28 = arith.constant 0 : index
    %70 = vector.load %arg8[%c0_27, %c0_28] : memref<64x64xbf16, #tpu.memory_space<vmem>>, vector<64x64xbf16>
    %cst_29 = arith.constant dense<0.000000e+00> : vector<1x64xf32>
    %71 = tpu.matmul %69, %70, %cst_29 {dimension_numbers = #tpu.dot_dimension_numbers<[1], [0], [0], [1], [0, 0, 1, 1], [], []>} : vector<1x64xbf16>, vector<64x64xbf16>, vector<1x64xf32> -> vector<1x64xf32>
    %c0_30 = arith.constant 0 : index
    %c0_31 = arith.constant 0 : index
    %72 = vector.load %arg9[%c0_30, %c0_31] : memref<1x64xf32, #tpu.memory_space<vmem>>, vector<1x64xf32>
    %73 = arith.addf %71, %72 : vector<1x64xf32>
    %c0_32 = arith.constant 0 : index
    %c0_33 = arith.constant 0 : index
    %74 = vector.load %arg10[%c0_32, %c0_33] : memref<1x64xf32, #tpu.memory_space<vmem>>, vector<1x64xf32>
    %c0_34 = arith.constant 0 : index
    %c0_35 = arith.constant 0 : index
    %75 = vector.load %arg11[%c0_34, %c0_35] : memref<1x64xf32, #tpu.memory_space<vmem>>, vector<1x64xf32>
    %cst_36 = arith.constant dense<0.000000e+00> : vector<1xf32>
    %76 = vector.multi_reduction <add>, %73, %cst_36 [1] : vector<1x64xf32> to vector<1xf32>
    %77 = vector.shape_cast %76 : vector<1xf32> to vector<1x1xf32>
    %cst_37 = arith.constant 6.400000e+01 : f32
    %78 = vector.broadcast %cst_37 : f32 to vector<1x1xf32>
    %79 = arith.divf %77, %78 : vector<1x1xf32>
    %80 = vector.broadcast %79 : vector<1x1xf32> to vector<1x64xf32>
    %81 = arith.subf %73, %80 : vector<1x64xf32>
    %82 = arith.mulf %81, %81 : vector<1x64xf32>
    %cst_38 = arith.constant dense<0.000000e+00> : vector<1xf32>
    %83 = vector.multi_reduction <add>, %82, %cst_38 [1] : vector<1x64xf32> to vector<1xf32>
    %84 = vector.shape_cast %83 : vector<1xf32> to vector<1x1xf32>
    %cst_39 = arith.constant 6.400000e+01 : f32
    %85 = vector.broadcast %cst_39 : f32 to vector<1x1xf32>
    %86 = arith.divf %84, %85 : vector<1x1xf32>
    %87 = vector.broadcast %79 : vector<1x1xf32> to vector<1x64xf32>
    %88 = arith.subf %73, %87 : vector<1x64xf32>
    %cst_40 = arith.constant 9.99999974E-6 : f32
    %89 = vector.broadcast %cst_40 : f32 to vector<1x1xf32>
    %90 = arith.addf %86, %89 : vector<1x1xf32>
    %91 = math.rsqrt %90 : vector<1x1xf32>
    %92 = vector.broadcast %91 : vector<1x1xf32> to vector<1x64xf32>
    %93 = arith.mulf %88, %92 : vector<1x64xf32>
    %94 = arith.mulf %93, %74 : vector<1x64xf32>
    %95 = arith.addf %94, %75 : vector<1x64xf32>
    %96 = arith.truncf %95 : vector<1x64xf32> to vector<1x64xbf16>
    %c0_41 = arith.constant 0 : index
    %c0_42 = arith.constant 0 : index
    %97 = vector.load %arg12[%c0_41, %c0_42] : memref<64x256xbf16, #tpu.memory_space<vmem>>, vector<64x256xbf16>
    %cst_43 = arith.constant dense<0.000000e+00> : vector<1x256xf32>
    %98 = tpu.matmul %96, %97, %cst_43 {dimension_numbers = #tpu.dot_dimension_numbers<[1], [0], [0], [1], [0, 0, 1, 1], [], []>} : vector<1x64xbf16>, vector<64x256xbf16>, vector<1x256xf32> -> vector<1x256xf32>
    %c0_44 = arith.constant 0 : index
    %c0_45 = arith.constant 0 : index
    %99 = vector.load %arg13[%c0_44, %c0_45] : memref<1x256xf32, #tpu.memory_space<vmem>>, vector<1x256xf32>
    %100 = arith.addf %98, %99 : vector<1x256xf32>
    %cst_46 = arith.constant 0.000000e+00 : f32
    %101 = vector.broadcast %cst_46 : f32 to vector<1x256xf32>
    %102 = arith.maximumf %100, %101 : vector<1x256xf32>
    %103 = arith.truncf %102 : vector<1x256xf32> to vector<1x256xbf16>
    %c0_47 = arith.constant 0 : index
    %c0_48 = arith.constant 0 : index
    %104 = vector.load %arg14[%c0_47, %c0_48] : memref<256x64xbf16, #tpu.memory_space<vmem>>, vector<256x64xbf16>
    %cst_49 = arith.constant dense<0.000000e+00> : vector<1x64xf32>
    %105 = tpu.matmul %103, %104, %cst_49 {dimension_numbers = #tpu.dot_dimension_numbers<[1], [0], [0], [1], [0, 0, 1, 1], [], []>} : vector<1x256xbf16>, vector<256x64xbf16>, vector<1x64xf32> -> vector<1x64xf32>
    %c0_50 = arith.constant 0 : index
    %c0_51 = arith.constant 0 : index
    %106 = vector.load %arg15[%c0_50, %c0_51] : memref<1x64xf32, #tpu.memory_space<vmem>>, vector<1x64xf32>
    %107 = arith.addf %105, %106 : vector<1x64xf32>
    %108 = arith.addf %73, %107 : vector<1x64xf32>
    %c0_52 = arith.constant 0 : index
    %c0_53 = arith.constant 0 : index
    %109 = vector.load %arg16[%c0_52, %c0_53] : memref<64x3xf32, #tpu.memory_space<vmem>>, vector<64x3xf32>
    %cst_54 = arith.constant dense<0.000000e+00> : vector<1x3xf32>
    %110 = tpu.matmul %108, %109, %cst_54 {dimension_numbers = #tpu.dot_dimension_numbers<[1], [0], [0], [1], [0, 0, 1, 1], [], []>} : vector<1x64xf32>, vector<64x3xf32>, vector<1x3xf32> -> vector<1x3xf32>
    %c0_55 = arith.constant 0 : index
    %c0_56 = arith.constant 0 : index
    %111 = vector.load %arg17[%c0_55, %c0_56] : memref<1x3xf32, #tpu.memory_space<vmem>>, vector<1x3xf32>
    %112 = arith.addf %110, %111 : vector<1x3xf32>
    %c0_57 = arith.constant 0 : index
    %c0_58 = arith.constant 0 : index
    %c0_59 = arith.constant 0 : index
    %113 = vector.load %arg18[%c0_57, %c0_58, %c0_59] : memref<1x1x3xf32, #tpu.memory_space<vmem>>, vector<1x1x3xf32>
    %114 = vector.shape_cast %113 : vector<1x1x3xf32> to vector<1x3xf32>
    %115 = vector.shape_cast %112 : vector<1x3xf32> to vector<1x1x3xf32>
    tpu.vector_store %arg18[%c0_57, %c0_58, %c0_59], %115 {strides = array<i32>} : memref<1x1x3xf32, #tpu.memory_space<vmem>>, vector<1x1x3xf32>,
    return
  }
  func.func @transform_0(%arg0: i32) -> (i32, i32, i32) {
    %c0_i32 = arith.constant 0 : i32
    %c0_i32_0 = arith.constant 0 : i32
    %c0_i32_1 = arith.constant 0 : i32
    return %arg0, %c0_i32, %c0_i32_0 : i32, i32, i32
  }
  func.func @transform_1(%arg0: i32) -> (i32, i32, i32) {
    %c0_i32 = arith.constant 0 : i32
    %c0_i32_0 = arith.constant 0 : i32
    %c0_i32_1 = arith.constant 0 : i32
    return %arg0, %c0_i32, %c0_i32_0 : i32, i32, i32
  }
  func.func @transform_2(%arg0: i32) -> (i32, i32) {
    %c0_i32 = arith.constant 0 : i32
    %c0_i32_0 = arith.constant 0 : i32
    %c0_i32_1 = arith.constant 0 : i32
    return %c0_i32, %c0_i32_0 : i32, i32
  }
  func.func @transform_3(%arg0: i32) -> (i32, i32) {
    %c0_i32 = arith.constant 0 : i32
    %c0_i32_0 = arith.constant 0 : i32
    %c0_i32_1 = arith.constant 0 : i32
    return %c0_i32, %c0_i32_0 : i32, i32
  }
  func.func @transform_4(%arg0: i32) -> (i32, i32) {
    %c0_i32 = arith.constant 0 : i32
    %c0_i32_0 = arith.constant 0 : i32
    %c0_i32_1 = arith.constant 0 : i32
    return %c0_i32, %c0_i32_0 : i32, i32
  }
  func.func @transform_5(%arg0: i32) -> (i32, i32) {
    %c0_i32 = arith.constant 0 : i32
    %c0_i32_0 = arith.constant 0 : i32
    %c0_i32_1 = arith.constant 0 : i32
    return %c0_i32, %c0_i32_0 : i32, i32
  }
  func.func @transform_6(%arg0: i32) -> (i32, i32) {
    %c0_i32 = arith.constant 0 : i32
    %c0_i32_0 = arith.constant 0 : i32
    %c0_i32_1 = arith.constant 0 : i32
    return %c0_i32, %c0_i32_0 : i32, i32
  }
  func.func @transform_7(%arg0: i32) -> (i32, i32) {
    %c0_i32 = arith.constant 0 : i32
    %c0_i32_0 = arith.constant 0 : i32
    %c0_i32_1 = arith.constant 0 : i32
    return %c0_i32, %c0_i32_0 : i32, i32
  }
  func.func @transform_8(%arg0: i32) -> (i32, i32) {
    %c0_i32 = arith.constant 0 : i32
    %c0_i32_0 = arith.constant 0 : i32
    %c0_i32_1 = arith.constant 0 : i32
    return %c0_i32, %c0_i32_0 : i32, i32
  }
  func.func @transform_9(%arg0: i32) -> (i32, i32) {
    %c0_i32 = arith.constant 0 : i32
    %c0_i32_0 = arith.constant 0 : i32
    %c0_i32_1 = arith.constant 0 : i32
    return %c0_i32, %c0_i32_0 : i32, i32
  }
  func.func @transform_10(%arg0: i32) -> (i32, i32) {
    %c0_i32 = arith.constant 0 : i32
    %c0_i32_0 = arith.constant 0 : i32
    %c0_i32_1 = arith.constant 0 : i32
    return %c0_i32, %c0_i32_0 : i32, i32
  }
  func.func @transform_11(%arg0: i32) -> (i32, i32) {
    %c0_i32 = arith.constant 0 : i32
    %c0_i32_0 = arith.constant 0 : i32
    %c0_i32_1 = arith.constant 0 : i32
    return %c0_i32, %c0_i32_0 : i32, i32
  }
  func.func @transform_12(%arg0: i32) -> (i32, i32) {
    %c0_i32 = arith.constant 0 : i32
    %c0_i32_0 = arith.constant 0 : i32
    %c0_i32_1 = arith.constant 0 : i32
    return %c0_i32, %c0_i32_0 : i32, i32
  }
  func.func @transform_13(%arg0: i32) -> (i32, i32) {
    %c0_i32 = arith.constant 0 : i32
    %c0_i32_0 = arith.constant 0 : i32
    %c0_i32_1 = arith.constant 0 : i32
    return %c0_i32, %c0_i32_0 : i32, i32
  }
  func.func @transform_14(%arg0: i32) -> (i32, i32) {
    %c0_i32 = arith.constant 0 : i32
    %c0_i32_0 = arith.constant 0 : i32
    %c0_i32_1 = arith.constant 0 : i32
    return %c0_i32, %c0_i32_0 : i32, i32
  }
  func.func @transform_15(%arg0: i32) -> (i32, i32) {
    %c0_i32 = arith.constant 0 : i32
    %c0_i32_0 = arith.constant 0 : i32
    %c0_i32_1 = arith.constant 0 : i32
    return %c0_i32, %c0_i32_0 : i32, i32
  }
  func.func @transform_16(%arg0: i32) -> (i32, i32) {
    %c0_i32 = arith.constant 0 : i32
    %c0_i32_0 = arith.constant 0 : i32
    %c0_i32_1 = arith.constant 0 : i32
    return %c0_i32, %c0_i32_0 : i32, i32
  }
  func.func @transform_17(%arg0: i32) -> (i32, i32, i32) {
    %c0_i32 = arith.constant 0 : i32
    %c0_i32_0 = arith.constant 0 : i32
    %c0_i32_1 = arith.constant 0 : i32
    return %arg0, %c0_i32, %c0_i32_0 : i32, i32, i32
  }
}

</mosaic_0001>

<llo_original>
// kernel: lt.8
$region0: #{lt.8}
  %s0 = inlined_call_operand.vmem [shape: s32[4,7], index: 0, kind: input, shape index: {}]
  %s1 = inlined_call_operand.vmem [shape: s32[28], index: 1, kind: output, shape index: {}]
  $region1: #{lt.8} parent=0
    #allocation0 [shape = 'u8[4096]{0}', space=vmem, size = 0x1000, scoped, tag = 'scoped mem for output reshape']
    #allocation1 [shape = 'u8[4096]{0}', space=vmem, size = 0x1000, scoped, tag = 'scoped mem for input reshape']
    %s3 = ssub.s32 16, 1
    %v4 = vld [vmem:[%s0] sm:%s3]
    %5 = vst [vmem:[#allocation1] sm:%s3] %v4
    %v6 = vld [vmem:[#allocation1] sm:$0x1]
    %vm7 = vcmask 56320
    %8 = vst.msk [vmem:[#allocation0] sm:$0x1] %vm7, %v6
    %s9 = scalar_lea.vmem [#allocation1], 3
    %v10 = vld [vmem:[%s9] sm:$0x1]
    %11 = vrot.lane.b32.xlu0 %v10, 21
    %v12 = vpop.permute.xlu0 %11
    %vm13 = vcmask 228520
    %14 = vst.msk [vmem:[#allocation0] sm:$0x1] %vm13, %v12
    %s15 = scalar_lea.vmem [#allocation1], 2
    %v16 = vld [vmem:[%s15] sm:$0x1]
    %17 = vrot.lane.b32.xlu0 %v16, 14
    %v18 = vpop.permute.xlu0 %17
    %vm19 = vcmask 171120
    %20 = vst.msk [vmem:[#allocation0] sm:$0x1] %vm19, %v18
    %s21 = scalar_lea.vmem [#allocation1], 1
    %v22 = vld [vmem:[%s21] sm:$0x1]
    %23 = vrot.lane.b32.xlu0 %v22, 7
    %v24 = vpop.permute.xlu0 %23
    %vm25 = vcmask 113720
    %26 = vst.msk [vmem:[#allocation0] sm:$0x1] %vm25, %v24
    %s28 = ssub.s32 2, 1
    %v29 = vld [vmem:[#allocation0] sm:%s28]
    %s31 = ssub.s32 2, 1
    %32 = vst [vmem:[%s1] sm:%s31] %v29

// kernel: mul.43
$region0: #{mul.43}
  %s0 = inlined_call_operand.vmem [shape: f32[4,7], index: 0, kind: input, shape index: {}]
  %s1 = inlined_call_operand.vmem [shape: f32[28], index: 1, kind: output, shape index: {}]
  $region1: #{mul.43} parent=0
    #allocation0 [shape = 'u8[4096]{0}', space=vmem, size = 0x1000, scoped, tag = 'scoped mem for output reshape']
    #allocation1 [shape = 'u8[4096]{0}', space=vmem, size = 0x1000, scoped, tag = 'scoped mem for input reshape']
    %s3 = ssub.s32 16, 1
    %v4 = vld [vmem:[%s0] sm:%s3]
    %5 = vst [vmem:[#allocation1] sm:%s3] %v4
    %v6 = vld [vmem:[#allocation1] sm:$0x1]
    %vm7 = vcmask 56320
    %8 = vst.msk [vmem:[#allocation0] sm:$0x1] %vm7, %v6
    %s9 = scalar_lea.vmem [#allocation1], 3
    %v10 = vld [vmem:[%s9] sm:$0x1]
    %11 = vrot.lane.b32.xlu0 %v10, 21
    %v12 = vpop.permute.xlu0 %11
    %vm13 = vcmask 228520
    %14 = vst.msk [vmem:[#allocation0] sm:$0x1] %vm13, %v12
    %s15 = scalar_lea.vmem [#allocation1], 2
    %v16 = vld [vmem:[%s15] sm:$0x1]
    %17 = vrot.lane.b32.xlu0 %v16, 14
    %v18 = vpop.permute.xlu0 %17
    %vm19 = vcmask 171120
    %20 = vst.msk [vmem:[#allocation0] sm:$0x1] %vm19, %v18
    %s21 = scalar_lea.vmem [#allocation1], 1
    %v22 = vld [vmem:[%s21] sm:$0x1]
    %23 = vrot.lane.b32.xlu0 %v22, 7
    %v24 = vpop.permute.xlu0 %23
    %vm25 = vcmask 113720
    %26 = vst.msk [vmem:[#allocation0] sm:$0x1] %vm25, %v24
    %s28 = ssub.s32 2, 1
    %v29 = vld [vmem:[#allocation0] sm:%s28]
    %s31 = ssub.s32 2, 1
    %32 = vst [vmem:[%s1] sm:%s31] %v29

// kernel: fast_weight_cde_v3_forward.1
$region0: #{fast_weight_cde_v3_forward.1}
  #allocation0 [shape = 'u32[]', space=smem, size = 0x4, offset = 0x4, fixed_abs, tag = 'smem constant byte address 0x4 - core index']
  #allocation1 [shape = 'u32[72,128]{1,0:T(1,128)}', space=vmem, size = 0x9000, scoped, tag = 'internal scratch']
  %s0 = inlined_call_operand.vmem [shape: f32[2,29,64], index: 0, kind: input, shape index: {}]
  %s1 = inlined_call_operand.vmem [shape: f32[2,29,1], index: 1, kind: input, shape index: {}]
  %s2 = inlined_call_operand.vmem [shape: f32[64,64], index: 2, kind: input, shape index: {}]
  %s3 = inlined_call_operand.vmem [shape: f32[1,64], index: 3, kind: input, shape index: {}]
  %s4 = inlined_call_operand.vmem [shape: f32[1,64], index: 4, kind: input, shape index: {}]
  %s5 = inlined_call_operand.vmem [shape: bf16[64,256], index: 5, kind: input, shape index: {}]
  %s6 = inlined_call_operand.vmem [shape: f32[1,256], index: 6, kind: input, shape index: {}]
  %s7 = inlined_call_operand.vmem [shape: bf16[64,64], index: 7, kind: input, shape index: {}]
  %s8 = inlined_call_operand.vmem [shape: f32[1,64], index: 8, kind: input, shape index: {}]
  %s9 = inlined_call_operand.vmem [shape: f32[1,64], index: 9, kind: input, shape index: {}]
  %s10 = inlined_call_operand.vmem [shape: f32[1,64], index: 10, kind: input, shape index: {}]
  %s11 = inlined_call_operand.vmem [shape: bf16[64,256], index: 11, kind: input, shape index: {}]
  %s12 = inlined_call_operand.vmem [shape: f32[1,256], index: 12, kind: input, shape index: {}]
  %s13 = inlined_call_operand.vmem [shape: bf16[256,64], index: 13, kind: input, shape index: {}]
  %s14 = inlined_call_operand.vmem [shape: f32[1,64], index: 14, kind: input, shape index: {}]
  %s15 = inlined_call_operand.vmem [shape: f32[64,3], index: 15, kind: input, shape index: {}]
  %s16 = inlined_call_operand.vmem [shape: f32[1,3], index: 16, kind: input, shape index: {}]
  %s17 = inlined_call_operand.hbm [shape: f32[2,1,3], index: 17, kind: output, shape index: {}]
  %s18 = sld [smem:[#allocation0]]
  $region101: #{fast_weight_cde_v3_forward.1} parent=0
    _
  %s20 = ssub.s32 1, %s18
  %s21 = scalar_select 0, %s20, %s18
  $region1: #{fast_weight_cde_v3_forward.1} parent=0
    #allocation2 [shape = 'u8[1024]{0}', space=vmem, size = 0x400, scoped, tag = 'output window, operand 0']
    #allocation3 [shape = 's32[2]{0}', space=sflag, size = 0x8, scoped, tag = 'scoped memory for fast_weight_cde_v3_forward.1']
    %22 = vsyncpa [#allocation3], 0
    %s23 = scalar_lea.sflag [#allocation3], 1
    %24 = vsyncpa %s23, 0
    loop: start=0, step=1, limit=4
    $region2: #{fast_weight_cde_v3_forward.1} parent=1 // loop_pre_header
      _
    $region3: #{fast_weight_cde_v3_forward.1} parent=1 // loop_header
      %s26 = sphi 0, %s30
      %p27 = scmp.ge.s32.totalorder %s26, 4
      %s36 = sphi 0, %s38
      %s39 = sphi 0, %s36
      %s40 = sphi 0, %s39
      %s56 = sphi 0, %s40
      %s62 = sphi 0, %s64
      %s65 = sphi 0, %s62
      %s66 = sphi 0, %s65
      %s82 = sphi 0, %s66
      %s86 = sphi 0, %s86
      %s88 = sphi 0, %s86
      %s89 = sphi 0, %s88
      %s103 = sphi 0, %s89
      %s107 = sphi 0, %s107
      %s109 = sphi 0, %s107
      %s110 = sphi 0, %s109
      %s124 = sphi 0, %s110
      %s128 = sphi 0, %s128
      %s130 = sphi 0, %s128
      %s131 = sphi 0, %s130
      %s145 = sphi 0, %s131
      %s149 = sphi 0, %s149
      %s151 = sphi 0, %s149
      %s152 = sphi 0, %s151
      %s166 = sphi 0, %s152
      %s170 = sphi 0, %s170
      %s172 = sphi 0, %s170
      %s173 = sphi 0, %s172
      %s187 = sphi 0, %s173
      %s191 = sphi 0, %s191
      %s193 = sphi 0, %s191
      %s194 = sphi 0, %s193
      %s208 = sphi 0, %s194
      %s212 = sphi 0, %s212
      %s214 = sphi 0, %s212
      %s215 = sphi 0, %s214
      %s229 = sphi 0, %s215
      %s233 = sphi 0, %s233
      %s235 = sphi 0, %s233
      %s236 = sphi 0, %s235
      %s250 = sphi 0, %s236
      %s254 = sphi 0, %s254
      %s256 = sphi 0, %s254
      %s257 = sphi 0, %s256
      %s271 = sphi 0, %s257
      %s275 = sphi 0, %s275
      %s277 = sphi 0, %s275
      %s278 = sphi 0, %s277
      %s292 = sphi 0, %s278
      %s296 = sphi 0, %s296
      %s298 = sphi 0, %s296
      %s299 = sphi 0, %s298
      %s313 = sphi 0, %s299
      %s317 = sphi 0, %s317
      %s319 = sphi 0, %s317
      %s320 = sphi 0, %s319
      %s334 = sphi 0, %s320
      %s338 = sphi 0, %s338
      %s340 = sphi 0, %s338
      %s341 = sphi 0, %s340
      %s355 = sphi 0, %s341
      %s359 = sphi 0, %s359
      %s361 = sphi 0, %s359
      %s362 = sphi 0, %s361
      %s376 = sphi 0, %s362
      %s380 = sphi 0, %s380
      %s382 = sphi 0, %s380
      %s383 = sphi 0, %s382
      %s397 = sphi 0, %s383
      %s403 = sphi 0, %s405
      %s406 = sphi 0, %s403
      %s407 = sphi 0, %s406
      %s423 = sphi 0, %s407
    $region4: #{fast_weight_cde_v3_forward.1} parent=1 // loop_header_branch
      %29 = sbr.rel (%p27) target = $region8
    $region5: #{fast_weight_cde_v3_forward.1} parent=1 // loop_body
      %s31 = ssub.s32 %s26, 1
      %s32 = ssub.s32 %s26, 2
      %s33 = sadd.s32 %s26, 1
      %s34 = ssub.s32 %s26, %s33
      %p35 = scmp.eq.s32.totalorder %s34, 0
      %s37 = sadd.s32 %s36, 1
      %s38 = scalar_select %p35, %s36, %s37
      %p41 = pneg %p35
      %p42 = scmp.eq.s32.totalorder %s26, 1
      %p43 = por %p41, %p42
      %p44 = scmp.ne.s32.totalorder %s36, %s39
      %p45 = scmp.eq.s32.totalorder %s26, 0
      %p46 = por %p44, %p45
      %p47 = scmp.ne.s32.totalorder %s36, %s39
      %p48 = scmp.eq.s32.totalorder %s31, 1
      %p49 = por %p47, %p48
      %p50 = scmp.ne.s32.totalorder %s39, %s40
      %p51 = scmp.eq.s32.totalorder %s31, 0
      %p52 = por %p50, %p51
      %p53 = scmp.ne.s32.totalorder %s39, %s40
      %p54 = scmp.eq.s32.totalorder %s32, 1
      %p55 = por %p53, %p54
      %p57 = scmp.ne.s32.totalorder %s40, %s56
      %p58 = scmp.eq.s32.totalorder %s32, 0
      %p59 = por %p57, %p58
      %s60 = ssub.s32 %s26, %s33
      %p61 = scmp.eq.s32.totalorder %s60, 0
      %s63 = sadd.s32 %s62, 1
      %s64 = scalar_select %p61, %s62, %s63
      %p67 = pneg %p61
      %p68 = scmp.eq.s32.totalorder %s26, 1
      %p69 = por %p67, %p68
      %p70 = scmp.ne.s32.totalorder %s62, %s65
      %p71 = scmp.eq.s32.totalorder %s26, 0
      %p72 = por %p70, %p71
      %p73 = scmp.ne.s32.totalorder %s62, %s65
      %p74 = scmp.eq.s32.totalorder %s31, 1
      %p75 = por %p73, %p74
      %p76 = scmp.ne.s32.totalorder %s65, %s66
      %p77 = scmp.eq.s32.totalorder %s31, 0
      %p78 = por %p76, %p77
      %p79 = scmp.ne.s32.totalorder %s65, %s66
      %p80 = scmp.eq.s32.totalorder %s32, 1
      %p81 = por %p79, %p80
      %p83 = scmp.ne.s32.totalorder %s66, %s82
      %p84 = scmp.eq.s32.totalorder %s32, 0
      %p85 = por %p83, %p84
      %s87 = sadd.s32 %s86, 1
      %p90 = scmp.eq.s32.totalorder %s26, 1
      %p91 = scmp.ne.s32.totalorder %s86, %s88
      %p92 = scmp.eq.s32.totalorder %s26, 0
      %p93 = por %p91, %p92
      %p94 = scmp.ne.s32.totalorder %s86, %s88
      %p95 = scmp.eq.s32.totalorder %s31, 1
      %p96 = por %p94, %p95
      %p97 = scmp.ne.s32.totalorder %s88, %s89
      %p98 = scmp.eq.s32.totalorder %s31, 0
      %p99 = por %p97, %p98
      %p100 = scmp.ne.s32.totalorder %s88, %s89
      %p101 = scmp.eq.s32.totalorder %s32, 1
      %p102 = por %p100, %p101
      %p104 = scmp.ne.s32.totalorder %s89, %s103
      %p105 = scmp.eq.s32.totalorder %s32, 0
      %p106 = por %p104, %p105
      %s108 = sadd.s32 %s107, 1
      %p111 = scmp.eq.s32.totalorder %s26, 1
      %p112 = scmp.ne.s32.totalorder %s107, %s109
      %p113 = scmp.eq.s32.totalorder %s26, 0
      %p114 = por %p112, %p113
      %p115 = scmp.ne.s32.totalorder %s107, %s109
      %p116 = scmp.eq.s32.totalorder %s31, 1
      %p117 = por %p115, %p116
      %p118 = scmp.ne.s32.totalorder %s109, %s110
      %p119 = scmp.eq.s32.totalorder %s31, 0
      %p120 = por %p118, %p119
      %p121 = scmp.ne.s32.totalorder %s109, %s110
      %p122 = scmp.eq.s32.totalorder %s32, 1
      %p123 = por %p121, %p122
      %p125 = scmp.ne.s32.totalorder %s110, %s124
      %p126 = scmp.eq.s32.totalorder %s32, 0
      %p127 = por %p125, %p126
      %s129 = sadd.s32 %s128, 1
      %p132 = scmp.eq.s32.totalorder %s26, 1
      %p133 = scmp.ne.s32.totalorder %s128, %s130
      %p134 = scmp.eq.s32.totalorder %s26, 0
      %p135 = por %p133, %p134
      %p136 = scmp.ne.s32.totalorder %s128, %s130
      %p137 = scmp.eq.s32.totalorder %s31, 1
      %p138 = por %p136, %p137
      %p139 = scmp.ne.s32.totalorder %s130, %s131
      %p140 = scmp.eq.s32.totalorder %s31, 0
      %p141 = por %p139, %p140
      %p142 = scmp.ne.s32.totalorder %s130, %s131
      %p143 = scmp.eq.s32.totalorder %s32, 1
      %p144 = por %p142, %p143
      %p146 = scmp.ne.s32.totalorder %s131, %s145
      %p147 = scmp.eq.s32.totalorder %s32, 0
      %p148 = por %p146, %p147
      %s150 = sadd.s32 %s149, 1
      %p153 = scmp.eq.s32.totalorder %s26, 1
      %p154 = scmp.ne.s32.totalorder %s149, %s151
      %p155 = scmp.eq.s32.totalorder %s26, 0
      %p156 = por %p154, %p155
      %p157 = scmp.ne.s32.totalorder %s149, %s151
      %p158 = scmp.eq.s32.totalorder %s31, 1
      %p159 = por %p157, %p158
      %p160 = scmp.ne.s32.totalorder %s151, %s152
      %p161 = scmp.eq.s32.totalorder %s31, 0
      %p162 = por %p160, %p161
      %p163 = scmp.ne.s32.totalorder %s151, %s152
      %p164 = scmp.eq.s32.totalorder %s32, 1
      %p165 = por %p163, %p164
      %p167 = scmp.ne.s32.totalorder %s152, %s166
      %p168 = scmp.eq.s32.totalorder %s32, 0
      %p169 = por %p167, %p168
      %s171 = sadd.s32 %s170, 1
      %p174 = scmp.eq.s32.totalorder %s26, 1
      %p175 = scmp.ne.s32.totalorder %s170, %s172
      %p176 = scmp.eq.s32.totalorder %s26, 0
      %p177 = por %p175, %p176
      %p178 = scmp.ne.s32.totalorder %s170, %s172
      %p179 = scmp.eq.s32.totalorder %s31, 1
      %p180 = por %p178, %p179
      %p181 = scmp.ne.s32.totalorder %s172, %s173
      %p182 = scmp.eq.s32.totalorder %s31, 0
      %p183 = por %p181, %p182
      %p184 = scmp.ne.s32.totalorder %s172, %s173
      %p185 = scmp.eq.s32.totalorder %s32, 1
      %p186 = por %p184, %p185
      %p188 = scmp.ne.s32.totalorder %s173, %s187
      %p189 = scmp.eq.s32.totalorder %s32, 0
      %p190 = por %p188, %p189
      %s192 = sadd.s32 %s191, 1
      %p195 = scmp.eq.s32.totalorder %s26, 1
      %p196 = scmp.ne.s32.totalorder %s191, %s193
      %p197 = scmp.eq.s32.totalorder %s26, 0
      %p198 = por %p196, %p197
      %p199 = scmp.ne.s32.totalorder %s191, %s193
      %p200 = scmp.eq.s32.totalorder %s31, 1
      %p201 = por %p199, %p200
      %p202 = scmp.ne.s32.totalorder %s193, %s194
      %p203 = scmp.eq.s32.totalorder %s31, 0
      %p204 = por %p202, %p203
      %p205 = scmp.ne.s32.totalorder %s193, %s194
      %p206 = scmp.eq.s32.totalorder %s32, 1
      %p207 = por %p205, %p206
      %p209 = scmp.ne.s32.totalorder %s194, %s208
      %p210 = scmp.eq.s32.totalorder %s32, 0
      %p211 = por %p209, %p210
      %s213 = sadd.s32 %s212, 1
      %p216 = scmp.eq.s32.totalorder %s26, 1
      %p217 = scmp.ne.s32.totalorder %s212, %s214
      %p218 = scmp.eq.s32.totalorder %s26, 0
      %p219 = por %p217, %p218
      %p220 = scmp.ne.s32.totalorder %s212, %s214
      %p221 = scmp.eq.s32.totalorder %s31, 1
      %p222 = por %p220, %p221
      %p223 = scmp.ne.s32.totalorder %s214, %s215
      %p224 = scmp.eq.s32.totalorder %s31, 0
      %p225 = por %p223, %p224
      %p226 = scmp.ne.s32.totalorder %s214, %s215
      %p227 = scmp.eq.s32.totalorder %s32, 1
      %p228 = por %p226, %p227
      %p230 = scmp.ne.s32.totalorder %s215, %s229
      %p231 = scmp.eq.s32.totalorder %s32, 0
      %p232 = por %p230, %p231
      %s234 = sadd.s32 %s233, 1
      %p237 = scmp.eq.s32.totalorder %s26, 1
      %p238 = scmp.ne.s32.totalorder %s233, %s235
      %p239 = scmp.eq.s32.totalorder %s26, 0
      %p240 = por %p238, %p239
      %p241 = scmp.ne.s32.totalorder %s233, %s235
      %p242 = scmp.eq.s32.totalorder %s31, 1
      %p243 = por %p241, %p242
      %p244 = scmp.ne.s32.totalorder %s235, %s236
      %p245 = scmp.eq.s32.totalorder %s31, 0
      %p246 = por %p244, %p245
      %p247 = scmp.ne.s32.totalorder %s235, %s236
      %p248 = scmp.eq.s32.totalorder %s32, 1
      %p249 = por %p247, %p248
      %p251 = scmp.ne.s32.totalorder %s236, %s250
      %p252 = scmp.eq.s32.totalorder %s32, 0
      %p253 = por %p251, %p252
      %s255 = sadd.s32 %s254, 1
      %p258 = scmp.eq.s32.totalorder %s26, 1
      %p259 = scmp.ne.s32.totalorder %s254, %s256
      %p260 = scmp.eq.s32.totalorder %s26, 0
      %p261 = por %p259, %p260
      %p262 = scmp.ne.s32.totalorder %s254, %s256
      %p263 = scmp.eq.s32.totalorder %s31, 1
      %p264 = por %p262, %p263
      %p265 = scmp.ne.s32.totalorder %s256, %s257
      %p266 = scmp.eq.s32.totalorder %s31, 0
      %p267 = por %p265, %p266
      %p268 = scmp.ne.s32.totalorder %s256, %s257
      %p269 = scmp.eq.s32.totalorder %s32, 1
      %p270 = por %p268, %p269
      %p272 = scmp.ne.s32.totalorder %s257, %s271
      %p273 = scmp.eq.s32.totalorder %s32, 0
      %p274 = por %p272, %p273
      %s276 = sadd.s32 %s275, 1
      %p279 = scmp.eq.s32.totalorder %s26, 1
      %p280 = scmp.ne.s32.totalorder %s275, %s277
      %p281 = scmp.eq.s32.totalorder %s26, 0
      %p282 = por %p280, %p281
      %p283 = scmp.ne.s32.totalorder %s275, %s277
      %p284 = scmp.eq.s32.totalorder %s31, 1
      %p285 = por %p283, %p284
      %p286 = scmp.ne.s32.totalorder %s277, %s278
      %p287 = scmp.eq.s32.totalorder %s31, 0
      %p288 = por %p286, %p287
      %p289 = scmp.ne.s32.totalorder %s277, %s278
      %p290 = scmp.eq.s32.totalorder %s32, 1
      %p291 = por %p289, %p290
      %p293 = scmp.ne.s32.totalorder %s278, %s292
      %p294 = scmp.eq.s32.totalorder %s32, 0
      %p295 = por %p293, %p294
      %s297 = sadd.s32 %s296, 1
      %p300 = scmp.eq.s32.totalorder %s26, 1
      %p301 = scmp.ne.s32.totalorder %s296, %s298
      %p302 = scmp.eq.s32.totalorder %s26, 0
      %p303 = por %p301, %p302
      %p304 = scmp.ne.s32.totalorder %s296, %s298
      %p305 = scmp.eq.s32.totalorder %s31, 1
      %p306 = por %p304, %p305
      %p307 = scmp.ne.s32.totalorder %s298, %s299
      %p308 = scmp.eq.s32.totalorder %s31, 0
      %p309 = por %p307, %p308
      %p310 = scmp.ne.s32.totalorder %s298, %s299
      %p311 = scmp.eq.s32.totalorder %s32, 1
      %p312 = por %p310, %p311
      %p314 = scmp.ne.s32.totalorder %s299, %s313
      %p315 = scmp.eq.s32.totalorder %s32, 0
      %p316 = por %p314, %p315
      %s318 = sadd.s32 %s317, 1
      %p321 = scmp.eq.s32.totalorder %s26, 1
      %p322 = scmp.ne.s32.totalorder %s317, %s319
      %p323 = scmp.eq.s32.totalorder %s26, 0
      %p324 = por %p322, %p323
      %p325 = scmp.ne.s32.totalorder %s317, %s319
      %p326 = scmp.eq.s32.totalorder %s31, 1
      %p327 = por %p325, %p326
      %p328 = scmp.ne.s32.totalorder %s319, %s320
      %p329 = scmp.eq.s32.totalorder %s31, 0
      %p330 = por %p328, %p329
      %p331 = scmp.ne.s32.totalorder %s319, %s320
      %p332 = scmp.eq.s32.totalorder %s32, 1
      %p333 = por %p331, %p332
      %p335 = scmp.ne.s32.totalorder %s320, %s334
      %p336 = scmp.eq.s32.totalorder %s32, 0
      %p337 = por %p335, %p336
      %s339 = sadd.s32 %s338, 1
      %p342 = scmp.eq.s32.totalorder %s26, 1
      %p343 = scmp.ne.s32.totalorder %s338, %s340
      %p344 = scmp.eq.s32.totalorder %s26, 0
      %p345 = por %p343, %p344
      %p346 = scmp.ne.s32.totalorder %s338, %s340
      %p347 = scmp.eq.s32.totalorder %s31, 1
      %p348 = por %p346, %p347
      %p349 = scmp.ne.s32.totalorder %s340, %s341
      %p350 = scmp.eq.s32.totalorder %s31, 0
      %p351 = por %p349, %p350
      %p352 = scmp.ne.s32.totalorder %s340, %s341
      %p353 = scmp.eq.s32.totalorder %s32, 1
      %p354 = por %p352, %p353
      %p356 = scmp.ne.s32.totalorder %s341, %s355
      %p357 = scmp.eq.s32.totalorder %s32, 0
      %p358 = por %p356, %p357
      %s360 = sadd.s32 %s359, 1
      %p363 = scmp.eq.s32.totalorder %s26, 1
      %p364 = scmp.ne.s32.totalorder %s359, %s361
      %p365 = scmp.eq.s32.totalorder %s26, 0
      %p366 = por %p364, %p365
      %p367 = scmp.ne.s32.totalorder %s359, %s361
      %p368 = scmp.eq.s32.totalorder %s31, 1
      %p369 = por %p367, %p368
      %p370 = scmp.ne.s32.totalorder %s361, %s362
      %p371 = scmp.eq.s32.totalorder %s31, 0
      %p372 = por %p370, %p371
      %p373 = scmp.ne.s32.totalorder %s361, %s362
      %p374 = scmp.eq.s32.totalorder %s32, 1
      %p375 = por %p373, %p374
      %p377 = scmp.ne.s32.totalorder %s362, %s376
      %p378 = scmp.eq.s32.totalorder %s32, 0
      %p379 = por %p377, %p378
      %s381 = sadd.s32 %s380, 1
      %p384 = scmp.eq.s32.totalorder %s26, 1
      %p385 = scmp.ne.s32.totalorder %s380, %s382
      %p386 = scmp.eq.s32.totalorder %s26, 0
      %p387 = por %p385, %p386
      %p388 = scmp.ne.s32.totalorder %s380, %s382
      %p389 = scmp.eq.s32.totalorder %s31, 1
      %p390 = por %p388, %p389
      %p391 = scmp.ne.s32.totalorder %s382, %s383
      %p392 = scmp.eq.s32.totalorder %s31, 0
      %p393 = por %p391, %p392
      %p394 = scmp.ne.s32.totalorder %s382, %s383
      %p395 = scmp.eq.s32.totalorder %s32, 1
      %p396 = por %p394, %p395
      %p398 = scmp.ne.s32.totalorder %s383, %s397
      %p399 = scmp.eq.s32.totalorder %s32, 0
      %p400 = por %p398, %p399
      %s401 = ssub.s32 %s26, %s33
      %p402 = scmp.eq.s32.totalorder %s401, 0
      %s404 = sadd.s32 %s403, 1
      %s405 = scalar_select %p402, %s403, %s404
      %p408 = pneg %p402
      %p409 = scmp.eq.s32.totalorder %s26, 1
      %p410 = por %p408, %p409
      %p411 = scmp.ne.s32.totalorder %s403, %s406
      %p412 = scmp.eq.s32.totalorder %s26, 0
      %p413 = por %p411, %p412
      %p414 = scmp.ne.s32.totalorder %s403, %s406
      %p415 = scmp.eq.s32.totalorder %s31, 1
      %p416 = por %p414, %p415
      %p417 = scmp.ne.s32.totalorder %s406, %s407
      %p418 = scmp.eq.s32.totalorder %s31, 0
      %p419 = por %p417, %p418
      %p420 = scmp.ne.s32.totalorder %s406, %s407
      %p421 = scmp.eq.s32.totalorder %s32, 1
      %p422 = por %p420, %p421
      %p424 = scmp.ne.s32.totalorder %s407, %s423
      %p425 = scmp.eq.s32.totalorder %s32, 0
      %p426 = por %p424, %p425
      %p427 = scmp.le.s32.totalorder 1, %s26
      %p428 = scmp.lt.s32.totalorder %s26, 3
      %p429 = pnand %p427, %p428
      %p430 = pneg %p429
      // Predicated region
      $region9: #{fast_weight_cde_v3_forward.1} parent=5 // pred_check
        _
      $region10: #{fast_weight_cde_v3_forward.1} parent=5 // pred_check_branch
        %432 = sbr.rel (%p429) target = $region12
      $region11: #{fast_weight_cde_v3_forward.1} parent=5 // pred_region
        %s433 = ssub.s32 %s26, 1
        // Predicated region
        $region13: #{fast_weight_cde_v3_forward.1} parent=11 // pred_check
          %p434 = pneg %p99
        $region14: #{fast_weight_cde_v3_forward.1} parent=11 // pred_check_branch
          %436 = sbr.rel (%p434) target = $region16
        $region15: #{fast_weight_cde_v3_forward.1} parent=11 // pred_region
          _
        $region16: #{fast_weight_cde_v3_forward.1} parent=11 // pred_fallthru
          _
        // Predicated region
        $region17: #{fast_weight_cde_v3_forward.1} parent=11 // pred_check
          %p437 = pneg %p120
        $region18: #{fast_weight_cde_v3_forward.1} parent=11 // pred_check_branch
          %439 = sbr.rel (%p437) target = $region20
        $region19: #{fast_weight_cde_v3_forward.1} parent=11 // pred_region
          _
        $region20: #{fast_weight_cde_v3_forward.1} parent=11 // pred_fallthru
          _
        // Predicated region
        $region21: #{fast_weight_cde_v3_forward.1} parent=11 // pred_check
          %p440 = pneg %p141
        $region22: #{fast_weight_cde_v3_forward.1} parent=11 // pred_check_branch
          %442 = sbr.rel (%p440) target = $region24
        $region23: #{fast_weight_cde_v3_forward.1} parent=11 // pred_region
          _
        $region24: #{fast_weight_cde_v3_forward.1} parent=11 // pred_fallthru
          _
        // Predicated region
        $region25: #{fast_weight_cde_v3_forward.1} parent=11 // pred_check
          %p443 = pneg %p162
        $region26: #{fast_weight_cde_v3_forward.1} parent=11 // pred_check_branch
          %445 = sbr.rel (%p443) target = $region28
        $region27: #{fast_weight_cde_v3_forward.1} parent=11 // pred_region
          _
        $region28: #{fast_weight_cde_v3_forward.1} parent=11 // pred_fallthru
          _
        // Predicated region
        $region29: #{fast_weight_cde_v3_forward.1} parent=11 // pred_check
          %p446 = pneg %p183
        $region30: #{fast_weight_cde_v3_forward.1} parent=11 // pred_check_branch
          %448 = sbr.rel (%p446) target = $region32
        $region31: #{fast_weight_cde_v3_forward.1} parent=11 // pred_region
          _
        $region32: #{fast_weight_cde_v3_forward.1} parent=11 // pred_fallthru
          _
        // Predicated region
        $region33: #{fast_weight_cde_v3_forward.1} parent=11 // pred_check
          %p449 = pneg %p204
        $region34: #{fast_weight_cde_v3_forward.1} parent=11 // pred_check_branch
          %451 = sbr.rel (%p449) target = $region36
        $region35: #{fast_weight_cde_v3_forward.1} parent=11 // pred_region
          _
        $region36: #{fast_weight_cde_v3_forward.1} parent=11 // pred_fallthru
          _
        // Predicated region
        $region37: #{fast_weight_cde_v3_forward.1} parent=11 // pred_check
          %p452 = pneg %p225
        $region38: #{fast_weight_cde_v3_forward.1} parent=11 // pred_check_branch
          %454 = sbr.rel (%p452) target = $region40
        $region39: #{fast_weight_cde_v3_forward.1} parent=11 // pred_region
          _
        $region40: #{fast_weight_cde_v3_forward.1} parent=11 // pred_fallthru
          _
        // Predicated region
        $region41: #{fast_weight_cde_v3_forward.1} parent=11 // pred_check
          %p455 = pneg %p246
        $region42: #{fast_weight_cde_v3_forward.1} parent=11 // pred_check_branch
          %457 = sbr.rel (%p455) target = $region44
        $region43: #{fast_weight_cde_v3_forward.1} parent=11 // pred_region
          _
        $region44: #{fast_weight_cde_v3_forward.1} parent=11 // pred_fallthru
          _
        // Predicated region
        $region45: #{fast_weight_cde_v3_forward.1} parent=11 // pred_check
          %p458 = pneg %p267
        $region46: #{fast_weight_cde_v3_forward.1} parent=11 // pred_check_branch
          %460 = sbr.rel (%p458) target = $region48
        $region47: #{fast_weight_cde_v3_forward.1} parent=11 // pred_region
          _
        $region48: #{fast_weight_cde_v3_forward.1} parent=11 // pred_fallthru
          _
        // Predicated region
        $region49: #{fast_weight_cde_v3_forward.1} parent=11 // pred_check
          %p461 = pneg %p288
        $region50: #{fast_weight_cde_v3_forward.1} parent=11 // pred_check_branch
          %463 = sbr.rel (%p461) target = $region52
        $region51: #{fast_weight_cde_v3_forward.1} parent=11 // pred_region
          _
        $region52: #{fast_weight_cde_v3_forward.1} parent=11 // pred_fallthru
          _
        // Predicated region
        $region53: #{fast_weight_cde_v3_forward.1} parent=11 // pred_check
          %p464 = pneg %p309
        $region54: #{fast_weight_cde_v3_forward.1} parent=11 // pred_check_branch
          %466 = sbr.rel (%p464) target = $region56
        $region55: #{fast_weight_cde_v3_forward.1} parent=11 // pred_region
          _
        $region56: #{fast_weight_cde_v3_forward.1} parent=11 // pred_fallthru
          _
        // Predicated region
        $region57: #{fast_weight_cde_v3_forward.1} parent=11 // pred_check
          %p467 = pneg %p330
        $region58: #{fast_weight_cde_v3_forward.1} parent=11 // pred_check_branch
          %469 = sbr.rel (%p467) target = $region60
        $region59: #{fast_weight_cde_v3_forward.1} parent=11 // pred_region
          _
        $region60: #{fast_weight_cde_v3_forward.1} parent=11 // pred_fallthru
          _
        // Predicated region
        $region61: #{fast_weight_cde_v3_forward.1} parent=11 // pred_check
          %p470 = pneg %p351
        $region62: #{fast_weight_cde_v3_forward.1} parent=11 // pred_check_branch
          %472 = sbr.rel (%p470) target = $region64
        $region63: #{fast_weight_cde_v3_forward.1} parent=11 // pred_region
          _
        $region64: #{fast_weight_cde_v3_forward.1} parent=11 // pred_fallthru
          _
        // Predicated region
        $region65: #{fast_weight_cde_v3_forward.1} parent=11 // pred_check
          %p473 = pneg %p372
        $region66: #{fast_weight_cde_v3_forward.1} parent=11 // pred_check_branch
          %475 = sbr.rel (%p473) target = $region68
        $region67: #{fast_weight_cde_v3_forward.1} parent=11 // pred_region
          _
        $region68: #{fast_weight_cde_v3_forward.1} parent=11 // pred_fallthru
          _
        // Predicated region
        $region69: #{fast_weight_cde_v3_forward.1} parent=11 // pred_check
          %p476 = pneg %p393
        $region70: #{fast_weight_cde_v3_forward.1} parent=11 // pred_check_branch
          %478 = sbr.rel (%p476) target = $region72
        $region71: #{fast_weight_cde_v3_forward.1} parent=11 // pred_region
          _
        $region72: #{fast_weight_cde_v3_forward.1} parent=11 // pred_fallthru
          _
      $region12: #{fast_weight_cde_v3_forward.1} parent=5 // pred_fallthru
        _
      %p479 = scmp.lt.s32.totalorder %s26, 2
      // Predicated region
      $region73: #{fast_weight_cde_v3_forward.1} parent=5 // pred_check
        %p480 = pneg %p479
      $region74: #{fast_weight_cde_v3_forward.1} parent=5 // pred_check_branch
        %482 = sbr.rel (%p480) target = $region76
      $region75: #{fast_weight_cde_v3_forward.1} parent=5 // pred_region
        // Predicated region
        $region77: #{fast_weight_cde_v3_forward.1} parent=75 // pred_check
          %p483 = pneg %p46
        $region78: #{fast_weight_cde_v3_forward.1} parent=75 // pred_check_branch
          %485 = sbr.rel (%p483) target = $region80
        $region79: #{fast_weight_cde_v3_forward.1} parent=75 // pred_region
          %p486 = scmp.lt.s32.totalorder %s26, 1
          %s487 = scalar_select %p486, %s26, 1
          %s488 = smul.addr %s487, 4
          %s489 = smul.addr %s488, 8
          %s490 = scalar_lea.vmem %s0, %s489
        $region80: #{fast_weight_cde_v3_forward.1} parent=75 // pred_fallthru
          _
        // Predicated region
        $region81: #{fast_weight_cde_v3_forward.1} parent=75 // pred_check
          %p491 = pneg %p72
        $region82: #{fast_weight_cde_v3_forward.1} parent=75 // pred_check_branch
          %493 = sbr.rel (%p491) target = $region84
        $region83: #{fast_weight_cde_v3_forward.1} parent=75 // pred_region
          %p494 = scmp.lt.s32.totalorder %s26, 1
          %s495 = scalar_select %p494, %s26, 1
          %s496 = smul.addr %s495, 4
          %s497 = smul.addr %s496, 8
          %s498 = scalar_lea.vmem %s1, %s497
        $region84: #{fast_weight_cde_v3_forward.1} parent=75 // pred_fallthru
          _
      $region76: #{fast_weight_cde_v3_forward.1} parent=5 // pred_fallthru
        _
      %p499 = scmp.le.s32.totalorder 1, %s26
      %p500 = scmp.lt.s32.totalorder %s26, 3
      %p501 = pnand %p499, %p500
      %p502 = pneg %p501
      // Predicated region
      $region85: #{fast_weight_cde_v3_forward.1} parent=5 // pred_check
        _
      $region86: #{fast_weight_cde_v3_forward.1} parent=5 // pred_check_branch
        %504 = sbr.rel (%p501) target = $region88
      $region87: #{fast_weight_cde_v3_forward.1} parent=5 // pred_region
        %s505 = ssub.s32 %s26, 1
        %p506 = scmp.lt.s32.totalorder %s31, 1
        %s507 = scalar_select %p506, %s31, 1
        %s508 = smul.addr %s507, 4
        %s509 = smul.addr %s508, 8
        %s510 = scalar_lea.vmem %s0, %s509
        %p511 = pneg %p52
        %p512 = pneg %p49
        %p513 = scmp.lt.s32.totalorder %s31, 1
        %s514 = scalar_select %p513, %s31, 1
        %s515 = smul.addr %s514, 4
        %s516 = smul.addr %s515, 8
        %s517 = scalar_lea.vmem %s1, %s516
        %p518 = pneg %p78
        %p519 = pneg %p75
        %p520 = pneg %p99
        %p521 = pneg %p96
        %p522 = pneg %p120
        %p523 = pneg %p117
        %p524 = pneg %p141
        %p525 = pneg %p138
        %p526 = pneg %p162
        %p527 = pneg %p159
        %p528 = pneg %p183
        %p529 = pneg %p180
        %p530 = pneg %p204
        %p531 = pneg %p201
        %p532 = pneg %p225
        %p533 = pneg %p222
        %p534 = pneg %p246
        %p535 = pneg %p243
        %p536 = pneg %p267
        %p537 = pneg %p264
        %p538 = pneg %p288
        %p539 = pneg %p285
        %p540 = pneg %p309
        %p541 = pneg %p306
        %p542 = pneg %p330
        %p543 = pneg %p327
        %p544 = pneg %p351
        %p545 = pneg %p348
        %p546 = pneg %p372
        %p547 = pneg %p369
        %p548 = pneg %p393
        %p549 = pneg %p390
        %p550 = pneg %p419
        %p551 = pneg %p416
        %s552 = sand.u32 %s406, 1
        %s553 = scalar_lea.sflag [#allocation3], %s552
        %s554 = sand.u32 %s406, 1
        %s555 = scalar_lea.vmem [#allocation2], %s554
        %p556 = scmp.lt.s32.totalorder %s31, 1
        %s557 = scalar_select %p556, %s31, 1
        %s558 = smul.addr %s557, 4
        %s559 = smul.addr %s558, 8
        %s560 = scalar_lea.vmem %s0, %s559
        %p561 = scmp.lt.s32.totalorder %s31, 1
        %s562 = scalar_select %p561, %s31, 1
        %s563 = smul.addr %s562, 4
        %s564 = smul.addr %s563, 8
        %s565 = scalar_lea.vmem %s1, %s564
        %v567 = vld [vmem:[%s560] sm:$0xff]
        %v568 = vld [vmem:[%s560 + $0x8] sm:$0xff]
        %v569 = vld [vmem:[%s560 + $0x10] sm:$0xff]
        %v570 = vld [vmem:[%s560 + $0x18] sm:$0x1f]
        %v571 = vld [vmem:[%s565] sm:$0xff]
        %v572 = vld [vmem:[%s565 + $0x8] sm:$0xff]
        %v573 = vld [vmem:[%s565 + $0x10] sm:$0xff]
        %v574 = vld [vmem:[%s565 + $0x18] sm:$0x1f]
        %v575 = vld [vmem:[%s2] sm:$0xff]
        %v576 = vld [vmem:[%s2 + $0x8] sm:$0xff]
        %v577 = vld [vmem:[%s2 + $0x10] sm:$0xff]
        %v578 = vld [vmem:[%s2 + $0x18] sm:$0xff]
        %v579 = vld [vmem:[%s2 + $0x20] sm:$0xff]
        %v580 = vld [vmem:[%s2 + $0x28] sm:$0xff]
        %v581 = vld [vmem:[%s2 + $0x30] sm:$0xff]
        %v582 = vld [vmem:[%s2 + $0x38] sm:$0xff]
        %v583 = vld [vmem:[%s3] sm:$0x1]
        %v584 = vld [vmem:[%s4] sm:$0x1]
        %vm585 = vcmask 523264
        %v586 = vsel %vm585, %v567, 0.0
        %587 = vadd.xlane.f32.xlu0 %v586
        %v588 = vpop.xlane.xlu0 %587
        %v589 = vsel %vm585, %v568, 0.0
        %590 = vadd.xlane.f32.xlu0 %v589
        %v591 = vpop.xlane.xlu0 %590
        %v592 = vsel %vm585, %v569, 0.0
        %593 = vadd.xlane.f32.xlu0 %v592
        %v594 = vpop.xlane.xlu0 %593
        %vm595 = vcmask 520192
        %v596 = vsel %vm595, %v570, 0.0
        %597 = vadd.xlane.f32.xlu0 %v596
        %v598 = vpop.xlane.xlu0 %597
        %v599 = vrcp.pop 64.0
        %v600 = vmul.f32 64.0, %v599
        %v601 = vsub.f32 1.0, %v600
        %v602 = vmul.f32 %v599, %v601
        %v603 = vadd.f32 %v599, %v602
        %vm604 = vweird.f32 %v599
        %v605 = vsel %vm604, %v599, %v603
        %v606 = vmul.f32 %v588, %v605
        %v607 = vmul.f32 %v591, %v605
        %v608 = vmul.f32 %v594, %v605
        %v609 = vmul.f32 %v598, %v605
        %v610 = vsub.f32 %v567, %v606
        %v611 = vsub.f32 %v568, %v607
        %v612 = vsub.f32 %v569, %v608
        %v613 = vsub.f32 %v570, %v609
        %v614 = vmul.f32 %v610, %v610
        %v615 = vmul.f32 %v611, %v611
        %v616 = vmul.f32 %v612, %v612
        %v617 = vmul.f32 %v613, %v613
        %v618 = vsel %vm585, %v614, 0.0
        %619 = vadd.xlane.f32.xlu0 %v618
        %v620 = vpop.xlane.xlu0 %619
        %v621 = vsel %vm585, %v615, 0.0
        %622 = vadd.xlane.f32.xlu0 %v621
        %v623 = vpop.xlane.xlu0 %622
        %v624 = vsel %vm585, %v616, 0.0
        %625 = vadd.xlane.f32.xlu0 %v624
        %v626 = vpop.xlane.xlu0 %625
        %v627 = vsel %vm595, %v617, 0.0
        %628 = vadd.xlane.f32.xlu0 %v627
        %v629 = vpop.xlane.xlu0 %628
        %v630 = vmul.f32 %v620, %v605
        %v631 = vmul.f32 %v623, %v605
        %v632 = vmul.f32 %v626, %v605
        %v633 = vmul.f32 %v629, %v605
        %v634 = vadd.f32 %v630, 1e-05
        %v635 = vadd.f32 %v631, 1e-05
        %v636 = vadd.f32 %v632, 1e-05
        %v637 = vadd.f32 %v633, 1e-05
        %v638 = vrsqrt.pop %v634
        %v639 = vmul.f32 %v638, %v634
        %v640 = vmul.f32 %v639, %v638
        %v641 = vmul.f32 0.5, %v640
        %v642 = vsub.f32 1.5, %v641
        %v643 = vmul.f32 %v638, %v642
        %vm644 = vweird.f32 %v634
        %vm645 = vweird.f32 %v638
        %vm646 = vmor %vm644, %vm645
        %v647 = vsel %vm646, %v638, %v643
        %v648 = vrsqrt.pop %v635
        %v649 = vmul.f32 %v648, %v635
        %v650 = vmul.f32 %v649, %v648
        %v651 = vmul.f32 0.5, %v650
        %v652 = vsub.f32 1.5, %v651
        %v653 = vmul.f32 %v648, %v652
        %vm654 = vweird.f32 %v635
        %vm655 = vweird.f32 %v648
        %vm656 = vmor %vm654, %vm655
        %v657 = vsel %vm656, %v648, %v653
        %v658 = vrsqrt.pop %v636
        %v659 = vmul.f32 %v658, %v636
        %v660 = vmul.f32 %v659, %v658
        %v661 = vmul.f32 0.5, %v660
        %v662 = vsub.f32 1.5, %v661
        %v663 = vmul.f32 %v658, %v662
        %vm664 = vweird.f32 %v636
        %vm665 = vweird.f32 %v658
        %vm666 = vmor %vm664, %vm665
        %v667 = vsel %vm666, %v658, %v663
        %v668 = vrsqrt.pop %v637
        %v669 = vmul.f32 %v668, %v637
        %v670 = vmul.f32 %v669, %v668
        %v671 = vmul.f32 0.5, %v670
        %v672 = vsub.f32 1.5, %v671
        %v673 = vmul.f32 %v668, %v672
        %vm674 = vweird.f32 %v637
        %vm675 = vweird.f32 %v668
        %vm676 = vmor %vm674, %vm675
        %v677 = vsel %vm676, %v668, %v673
        %v678 = vmul.f32 %v610, %v647
        %v679 = vmul.f32 %v611, %v657
        %v680 = vmul.f32 %v612, %v667
        %v681 = vmul.f32 %v613, %v677
        %v683 = vperm.slane %v583, 0
        %v685 = vmul.f32 %v678, %v683
        %v686 = vmul.f32 %v679, %v683
        %v687 = vmul.f32 %v680, %v683
        %v688 = vmul.f32 %v681, %v683
        %v690 = vperm.slane %v584, 0
        %v692 = vadd.f32 %v685, %v690
        %v693 = vadd.f32 %v686, %v690
        %v694 = vadd.f32 %v687, %v690
        %v695 = vadd.f32 %v688, %v690
        %v696 = vpack.c.bf16 %v693, %v692
        %v697 = vpack.c.bf16 %v695, %v694
        %v698 = vld [vmem:[%s5] sm:$0xff]
        %v699 = vld [vmem:[%s5 + $0x8] sm:$0xff]
        %v700 = vld [vmem:[%s5 + $0x10] sm:$0xff]
        %v701 = vld [vmem:[%s5 + $0x18] sm:$0xff]
        %v702 = vld [vmem:[%s5 + $0x20] sm:$0xff]
        %v703 = vld [vmem:[%s5 + $0x28] sm:$0xff]
        %v704 = vld [vmem:[%s5 + $0x30] sm:$0xff]
        %v705 = vld [vmem:[%s5 + $0x38] sm:$0xff]
        %v706 = vld [vmem:[%s6] sm:$0x3]
        %v708 = vperm.slane %v706, 0
        %v709 = vperm.slane %v706, 1
        %v720 = vunpack.c.l.b16 %v698
        %v721 = vunpack.c.h.b16 %v698
        %v722 = vunpack.c.l.b16 %v699
        %v723 = vunpack.c.h.b16 %v699
        %v724 = vunpack.c.l.b16 %v700
        %v725 = vunpack.c.h.b16 %v700
        %v726 = vunpack.c.l.b16 %v701
        %v727 = vunpack.c.h.b16 %v701
        %v728 = vunpack.c.l.b16 %v702
        %v729 = vunpack.c.h.b16 %v702
        %v730 = vunpack.c.l.b16 %v703
        %v731 = vunpack.c.h.b16 %v703
        %v732 = vunpack.c.l.b16 %v704
        %v733 = vunpack.c.h.b16 %v704
        %v734 = vunpack.c.l.b16 %v705
        %v735 = vunpack.c.h.b16 %v705
        %v736 = vpack.c.b16 %v722, %v720
        %v737 = vpack.c.b16 %v723, %v721
        %v738 = vpack.c.b16 %v726, %v724
        %v739 = vpack.c.b16 %v727, %v725
        %v740 = vpack.c.b16 %v730, %v728
        %v741 = vpack.c.b16 %v731, %v729
        %v742 = vpack.c.b16 %v734, %v732
        %v743 = vpack.c.b16 %v735, %v733
        %v753 = vsel %vm585, %v696, 0
        %v756 = vsel %vm585, %v697, 0
        %758 = vmatpush.bf16.msra.mxu0 0
        %759 = vmatpush.bf16.msra.mxu0 0
        %760 = vmatpush.bf16.msra.mxu0 0
        %761 = vmatpush.bf16.msra.mxu0 0
        %762 = vmatpush.bf16.msra.mxu0 %v742
        %763 = vmatpush.bf16.msra.mxu0 %v740
        %764 = vmatpush.bf16.msra.mxu0 %v738
        %765 = vmatpush.bf16.msra.mxu0 %v736
        %766 = vmatmul.bf16.gmra.mxu0 %v753
        %v767 = vpop.f32.mrf.mxu0
        %v768 = vadd.f32 %v708, %v767
        %v769 = vpop.f32.mrf.mxu0
        %v770 = vadd.f32 %v708, %v769
        %771 = vmatmul.bf16.gmra.mxu0 %v756
        %v772 = vpop.f32.mrf.mxu0
        %v773 = vadd.f32 %v708, %v772
        %v774 = vpop.f32.mrf.mxu0
        %v775 = vadd.f32 %v708, %v774
        %776 = vdwg.mxu0
        %777 = vmatpush.bf16.msra.mxu0 0
        %778 = vmatpush.bf16.msra.mxu0 0
        %779 = vmatpush.bf16.msra.mxu0 0
        %780 = vmatpush.bf16.msra.mxu0 0
        %781 = vmatpush.bf16.msra.mxu0 %v743
        %782 = vmatpush.bf16.msra.mxu0 %v741
        %783 = vmatpush.bf16.msra.mxu0 %v739
        %784 = vmatpush.bf16.msra.mxu0 %v737
        %785 = vmatmul.bf16.gmra.mxu0 %v753
        %v786 = vpop.f32.mrf.mxu0
        %v787 = vadd.f32 %v709, %v786
        %v788 = vpop.f32.mrf.mxu0
        %v789 = vadd.f32 %v709, %v788
        %790 = vmatmul.bf16.gmra.mxu0 %v756
        %v791 = vpop.f32.mrf.mxu0
        %v792 = vadd.f32 %v709, %v791
        %v793 = vpop.f32.mrf.mxu0
        %v794 = vadd.f32 %v709, %v793
        %795 = vdwg.mxu0
        %v796 = vsel %vm585, %v768, -inf
        %797 = vmax.xlane.f32.xlu0 %v796
        %v798 = vpop.xlane.xlu0 %797
        %v799 = vsel %vm585, %v770, -inf
        %800 = vmax.xlane.f32.xlu0 %v799
        %v801 = vpop.xlane.xlu0 %800
        %v802 = vsel %vm585, %v773, -inf
        %803 = vmax.xlane.f32.xlu0 %v802
        %v804 = vpop.xlane.xlu0 %803
        %v805 = vsel %vm595, %v775, -inf
        %806 = vmax.xlane.f32.xlu0 %v805
        %v807 = vpop.xlane.xlu0 %806
        %v808 = vsub.f32 %v768, %v798
        %v809 = vsub.f32 %v770, %v801
        %v810 = vsub.f32 %v773, %v804
        %v811 = vsub.f32 %v775, %v807
        %v812 = vmul.f32 %v808, 1.442695
        %v813 = vpow.pop %v812
        %v814 = vmul.f32 %v809, 1.442695
        %v815 = vpow.pop %v814
        %v816 = vmul.f32 %v810, 1.442695
        %v817 = vpow.pop %v816
        %v818 = vmul.f32 %v811, 1.442695
        %v819 = vpow.pop %v818
        %v821 = vsel %vm585, %v813, 0
        %v824 = vsel %vm585, %v815, 0
        %v827 = vsel %vm585, %v817, 0
        %v830 = vsel %vm585, %v819, 0
        %832 = vmatpush.msra.mxu0 0.0
        %833 = vmatpush.msra.mxu0 0.0
        %834 = vmatpush.msra.mxu0 0.0
        %835 = vmatpush.msra.mxu0 0.0
        %836 = vmatpush.msra.mxu0 0.0
        %837 = vmatpush.msra.mxu0 0.0
        %838 = vmatpush.msra.mxu0 0.0
        %839 = vmatpush.msra.mxu0 0.0
        %840 = vmatpush.msra.mxu0 %v582
        %841 = vmatpush.msra.mxu0 %v581
        %842 = vmatpush.msra.mxu0 %v580
        %843 = vmatpush.msra.mxu0 %v579
        %844 = vmatpush.msra.mxu0 %v578
        %845 = vmatpush.msra.mxu0 %v577
        %846 = vmatpush.msra.mxu0 %v576
        %847 = vmatpush.msra.mxu0 %v575
        %848 = vmatmul.f32.gmra.mxu0 %v821
        %v849 = vpop.f32.mrf.mxu0
        %v850 = vadd.f32 0.0, %v849
        %851 = vmatmul.f32.gmra.mxu0 %v824
        %v852 = vpop.f32.mrf.mxu0
        %v853 = vadd.f32 0.0, %v852
        %854 = vmatmul.f32.gmra.mxu0 %v827
        %v855 = vpop.f32.mrf.mxu0
        %v856 = vadd.f32 0.0, %v855
        %857 = vmatmul.f32.gmra.mxu0 %v830
        %v858 = vpop.f32.mrf.mxu0
        %v859 = vadd.f32 0.0, %v858
        %860 = vdwg.mxu0
        %v861 = vrcp.pop %v850
        %v862 = vmul.f32 %v850, %v861
        %v863 = vsub.f32 1.0, %v862
        %v864 = vmul.f32 %v861, %v863
        %v865 = vadd.f32 %v861, %v864
        %vm866 = vweird.f32 %v850
        %vm867 = vweird.f32 %v861
        %vm868 = vmor %vm866, %vm867
        %v869 = vsel %vm868, %v861, %v865
        %v870 = vand.u32 2147483647, %v850
        %vm871 = vcmp.eq.f32.partialorder %v870, 8.507059e+37
        %v872 = vand.u32 %v850, 2147483648
        %v873 = vor.u32 1.1754944e-38, %v872
        %v874 = vsel %vm871, %v873, %v869
        %v875 = vmul.f32 %v813, %v874
        %v876 = vrcp.pop %v853
        %v877 = vmul.f32 %v853, %v876
        %v878 = vsub.f32 1.0, %v877
        %v879 = vmul.f32 %v876, %v878
        %v880 = vadd.f32 %v876, %v879
        %vm881 = vweird.f32 %v853
        %vm882 = vweird.f32 %v876
        %vm883 = vmor %vm881, %vm882
        %v884 = vsel %vm883, %v876, %v880
        %v885 = vand.u32 2147483647, %v853
        %vm886 = vcmp.eq.f32.partialorder %v885, 8.507059e+37
        %v887 = vand.u32 %v853, 2147483648
        %v888 = vor.u32 1.1754944e-38, %v887
        %v889 = vsel %vm886, %v888, %v884
        %v890 = vmul.f32 %v815, %v889
        %v891 = vrcp.pop %v856
        %v892 = vmul.f32 %v856, %v891
        %v893 = vsub.f32 1.0, %v892
        %v894 = vmul.f32 %v891, %v893
        %v895 = vadd.f32 %v891, %v894
        %vm896 = vweird.f32 %v856
        %vm897 = vweird.f32 %v891
        %vm898 = vmor %vm896, %vm897
        %v899 = vsel %vm898, %v891, %v895
        %v900 = vand.u32 2147483647, %v856
        %vm901 = vcmp.eq.f32.partialorder %v900, 8.507059e+37
        %v902 = vand.u32 %v856, 2147483648
        %v903 = vor.u32 1.1754944e-38, %v902
        %v904 = vsel %vm901, %v903, %v899
        %v905 = vmul.f32 %v817, %v904
        %v906 = vrcp.pop %v859
        %v907 = vmul.f32 %v859, %v906
        %v908 = vsub.f32 1.0, %v907
        %v909 = vmul.f32 %v906, %v908
        %v910 = vadd.f32 %v906, %v909
        %vm911 = vweird.f32 %v859
        %vm912 = vweird.f32 %v906
        %vm913 = vmor %vm911, %vm912
        %v914 = vsel %vm913, %v906, %v910
        %v915 = vand.u32 2147483647, %v859
        %vm916 = vcmp.eq.f32.partialorder %v915, 8.507059e+37
        %v917 = vand.u32 %v859, 2147483648
        %v918 = vor.u32 1.1754944e-38, %v917
        %v919 = vsel %vm916, %v918, %v914
        %v920 = vmul.f32 %v819, %v919
        %vm921 = vcmask 520196
        %v922 = vsel %vm921, %v794, -inf
        %923 = vmax.xlane.f32.xlu0 %v922
        %v924 = vpop.xlane.xlu0 %923
        %v925 = vsub.f32 %v794, %v924
        %v926 = vmul.f32 %v925, 1.442695
        %v927 = vpow.pop %v926
        %v929 = vrot.slane %v927, 4
        %v930 = vsel %vm585, %v929, 0
        %932 = vmatpush.msra.mxu0 0.0
        %933 = vmatpush.msra.mxu0 0.0
        %934 = vmatpush.msra.mxu0 0.0
        %935 = vmatpush.msra.mxu0 0.0
        %936 = vmatpush.msra.mxu0 0.0
        %937 = vmatpush.msra.mxu0 0.0
        %938 = vmatpush.msra.mxu0 0.0
        %939 = vmatpush.msra.mxu0 0.0
        %940 = vmatpush.msra.mxu0 %v582
        %941 = vmatpush.msra.mxu0 %v581
        %942 = vmatpush.msra.mxu0 %v580
        %943 = vmatpush.msra.mxu0 %v579
        %944 = vmatpush.msra.mxu0 %v578
        %945 = vmatpush.msra.mxu0 %v577
        %946 = vmatpush.msra.mxu0 %v576
        %947 = vmatpush.msra.mxu0 %v575
        %948 = vmatmul.f32.gmra.mxu0 %v930
        %v949 = vpop.f32.mrf.mxu0
        %v950 = vadd.f32 0.0, %v949
        %951 = vdwg.mxu0
        %v953 = vrot.slane %v950, 4
        %v955 = vrcp.pop %v953
        %v956 = vmul.f32 %v953, %v955
        %v957 = vsub.f32 1.0, %v956
        %v958 = vmul.f32 %v955, %v957
        %v959 = vadd.f32 %v955, %v958
        %vm960 = vweird.f32 %v953
        %vm961 = vweird.f32 %v955
        %vm962 = vmor %vm960, %vm961
        %v963 = vsel %vm962, %v955, %v959
        %v964 = vand.u32 2147483647, %v953
        %vm965 = vcmp.eq.f32.partialorder %v964, 8.507059e+37
        %v966 = vand.u32 %v953, 2147483648
        %v967 = vor.u32 1.1754944e-38, %v966
        %v968 = vsel %vm965, %v967, %v963
        %v969 = vmul.f32 %v927, %v968
        %v970 = vperm.slane %v969, 4
        %v971 = vmul.f32 %v875, %v970
        %v972 = vmul.f32 %v890, %v970
        %v973 = vmul.f32 %v905, %v970
        %v974 = vmul.f32 %v920, %v970
        %v976 = vsel %vm585, %v971, 0
        %v979 = vsel %vm585, %v972, 0
        %v982 = vsel %vm585, %v973, 0
        %v985 = vsel %vm585, %v974, 0
        %987 = vmatpush.msra.mxu0 0.0
        %988 = vmatpush.msra.mxu0 0.0
        %989 = vmatpush.msra.mxu0 0.0
        %990 = vmatpush.msra.mxu0 0.0
        %991 = vmatpush.msra.mxu0 0.0
        %992 = vmatpush.msra.mxu0 0.0
        %993 = vmatpush.msra.mxu0 0.0
        %994 = vmatpush.msra.mxu0 0.0
        %995 = vmatpush.msra.mxu0 %v582
        %996 = vmatpush.msra.mxu0 %v581
        %997 = vmatpush.msra.mxu0 %v580
        %998 = vmatpush.msra.mxu0 %v579
        %999 = vmatpush.msra.mxu0 %v578
        %1000 = vmatpush.msra.mxu0 %v577
        %1001 = vmatpush.msra.mxu0 %v576
        %1002 = vmatpush.msra.mxu0 %v575
        %1003 = vmatmul.f32.gmra.mxu0 %v976
        %v1004 = vpop.f32.mrf.mxu0
        %v1005 = vadd.f32 0.0, %v1004
        %1006 = vmatmul.f32.gmra.mxu0 %v979
        %v1007 = vpop.f32.mrf.mxu0
        %v1008 = vadd.f32 0.0, %v1007
        %1009 = vmatmul.f32.gmra.mxu0 %v982
        %v1010 = vpop.f32.mrf.mxu0
        %v1011 = vadd.f32 0.0, %v1010
        %1012 = vmatmul.f32.gmra.mxu0 %v985
        %v1013 = vpop.f32.mrf.mxu0
        %v1014 = vadd.f32 0.0, %v1013
        %1015 = vdwg.mxu0
        %v1016 = vxor.u32 %v787, 2147483648
        %v1017 = vxor.u32 %v789, 2147483648
        %v1018 = vxor.u32 %v792, 2147483648
        %v1019 = vxor.u32 %v794, 2147483648
        %v1020 = vmul.f32 %v1016, 1.442695
        %v1021 = vpow.pop %v1020
        %v1022 = vmul.f32 %v1017, 1.442695
        %v1023 = vpow.pop %v1022
        %v1024 = vmul.f32 %v1018, 1.442695
        %v1025 = vpow.pop %v1024
        %v1026 = vmul.f32 %v1019, 1.442695
        %v1027 = vpow.pop %v1026
        %v1028 = vadd.f32 %v1021, 1.0
        %v1029 = vadd.f32 %v1023, 1.0
        %v1030 = vadd.f32 %v1025, 1.0
        %v1031 = vadd.f32 %v1027, 1.0
        %v1032 = vrcp.pop %v1028
        %v1033 = vmul.f32 %v1028, %v1032
        %v1034 = vsub.f32 1.0, %v1033
        %v1035 = vmul.f32 %v1032, %v1034
        %v1036 = vadd.f32 %v1032, %v1035
        %vm1037 = vweird.f32 %v1028
        %vm1038 = vweird.f32 %v1032
        %vm1039 = vmor %vm1037, %vm1038
        %v1040 = vsel %vm1039, %v1032, %v1036
        %v1041 = vand.u32 2147483647, %v1028
        %vm1042 = vcmp.eq.f32.partialorder %v1041, 8.507059e+37
        %v1043 = vand.u32 %v1028, 2147483648
        %v1044 = vor.u32 1.1754944e-38, %v1043
        %v1045 = vsel %vm1042, %v1044, %v1040
        %v1046 = vmul.f32 1.0, %v1045
        %v1047 = vrcp.pop %v1029
        %v1048 = vmul.f32 %v1029, %v1047
        %v1049 = vsub.f32 1.0, %v1048
        %v1050 = vmul.f32 %v1047, %v1049
        %v1051 = vadd.f32 %v1047, %v1050
        %vm1052 = vweird.f32 %v1029
        %vm1053 = vweird.f32 %v1047
        %vm1054 = vmor %vm1052, %vm1053
        %v1055 = vsel %vm1054, %v1047, %v1051
        %v1056 = vand.u32 2147483647, %v1029
        %vm1057 = vcmp.eq.f32.partialorder %v1056, 8.507059e+37
        %v1058 = vand.u32 %v1029, 2147483648
        %v1059 = vor.u32 1.1754944e-38, %v1058
        %v1060 = vsel %vm1057, %v1059, %v1055
        %v1061 = vmul.f32 1.0, %v1060
        %v1062 = vrcp.pop %v1030
        %v1063 = vmul.f32 %v1030, %v1062
        %v1064 = vsub.f32 1.0, %v1063
        %v1065 = vmul.f32 %v1062, %v1064
        %v1066 = vadd.f32 %v1062, %v1065
        %vm1067 = vweird.f32 %v1030
        %vm1068 = vweird.f32 %v1062
        %vm1069 = vmor %vm1067, %vm1068
        %v1070 = vsel %vm1069, %v1062, %v1066
        %v1071 = vand.u32 2147483647, %v1030
        %vm1072 = vcmp.eq.f32.partialorder %v1071, 8.507059e+37
        %v1073 = vand.u32 %v1030, 2147483648
        %v1074 = vor.u32 1.1754944e-38, %v1073
        %v1075 = vsel %vm1072, %v1074, %v1070
        %v1076 = vmul.f32 1.0, %v1075
        %v1077 = vrcp.pop %v1031
        %v1078 = vmul.f32 %v1031, %v1077
        %v1079 = vsub.f32 1.0, %v1078
        %v1080 = vmul.f32 %v1077, %v1079
        %v1081 = vadd.f32 %v1077, %v1080
        %vm1082 = vweird.f32 %v1031
        %vm1083 = vweird.f32 %v1077
        %vm1084 = vmor %vm1082, %vm1083
        %v1085 = vsel %vm1084, %v1077, %v1081
        %v1086 = vand.u32 2147483647, %v1031
        %vm1087 = vcmp.eq.f32.partialorder %v1086, 8.507059e+37
        %v1088 = vand.u32 %v1031, 2147483648
        %v1089 = vor.u32 1.1754944e-38, %v1088
        %v1090 = vsel %vm1087, %v1089, %v1085
        %v1091 = vmul.f32 1.0, %v1090
        %1093 = vset.pattern.permute.xlu0 0
        %1094 = vperm.xlu0 %1093, %v571
        %v1095 = vpop.permute.xlu0 %1094
        %1098 = vset.pattern.permute.xlu0 0
        %1099 = vperm.xlu0 %1098, %v572
        %v1100 = vpop.permute.xlu0 %1099
        %1103 = vset.pattern.permute.xlu0 0
        %1104 = vperm.xlu0 %1103, %v573
        %v1105 = vpop.permute.xlu0 %1104
        %1108 = vset.pattern.permute.xlu0 0
        %1109 = vperm.xlu0 %1108, %v574
        %v1110 = vpop.permute.xlu0 %1109
        %v1112 = vmul.f32 %v1095, %v1046
        %v1113 = vmul.f32 %v1100, %v1061
        %v1114 = vmul.f32 %v1105, %v1076
        %v1115 = vmul.f32 %v1110, %v1091
        %1120 = vrot.lane.b32.xlu0 %v1005, 64
        %v1121 = vpop.permute.xlu0 %1120
        %1122 = vrot.lane.b32.xlu0 %v1008, 64
        %v1123 = vpop.permute.xlu0 %1122
        %1124 = vrot.lane.b32.xlu0 %v1011, 64
        %v1125 = vpop.permute.xlu0 %1124
        %1126 = vrot.lane.b32.xlu0 %v1014, 64
        %v1127 = vpop.permute.xlu0 %1126
        %v1132 = vmul.f32 %v1112, %v1121
        %v1133 = vmul.f32 %v1113, %v1123
        %v1134 = vmul.f32 %v1114, %v1125
        %v1135 = vmul.f32 %v1115, %v1127
        %v1136 = vtanh.pop %v768
        %v1137 = vtanh.pop %v770
        %v1138 = vtanh.pop %v773
        %v1139 = vtanh.pop %v775
        %v1140 = vmul.f32 %v1132, %v1136
        %v1141 = vmul.f32 %v1133, %v1137
        %v1142 = vmul.f32 %v1134, %v1138
        %v1143 = vmul.f32 %v1135, %v1139
        %vm1144 = vcmask 1048064
        %v1145 = vsel %vm1144, %v1140, 0.0
        %v1146 = vsel %vm1144, %v1141, 0.0
        %v1147 = vadd.f32 %v1145, %v1146
        %v1148 = vsel %vm1144, %v1142, 0.0
        %v1149 = vadd.f32 %v1147, %v1148
        %vm1150 = vcmask 1044992
        %v1151 = vsel %vm1150, %v1143, 0.0
        %v1152 = vadd.f32 %v1149, %v1151
        %v1153 = vrot.slane %v1152, 4
        %v1154 = vadd.f32 %v1152, %v1153
        %v1155 = vrot.slane %v1154, 2
        %v1156 = vadd.f32 %v1154, %v1155
        %v1157 = vrot.slane %v1156, 1
        %v1158 = vadd.f32 %v1156, %v1157
        %v1159 = vpack.c.bf16 %v1158, %v1158
        %v1160 = vld [vmem:[%s7] sm:$0xf]
        %v1161 = vld [vmem:[%s7 + $0x4] sm:$0xf]
        %v1162 = vld [vmem:[%s7 + $0x8] sm:$0xf]
        %v1163 = vld [vmem:[%s7 + $0xc] sm:$0xf]
        %v1164 = vld [vmem:[%s7 + $0x10] sm:$0xf]
        %v1165 = vld [vmem:[%s7 + $0x14] sm:$0xf]
        %v1166 = vld [vmem:[%s7 + $0x18] sm:$0xf]
        %v1167 = vld [vmem:[%s7 + $0x1c] sm:$0xf]
        %v1168 = vld [vmem:[%s8] sm:$0x1]
        %1170 = vrot.lane.b32.xlu0 %v1159, 64
        %v1171 = vpop.permute.xlu0 %1170
        %v1180 = vunpack.c.l.b16 %v1160
        %v1181 = vunpack.c.l.b16 %v1161
        %v1182 = vunpack.c.l.b16 %v1162
        %v1183 = vunpack.c.l.b16 %v1163
        %v1184 = vunpack.c.l.b16 %v1164
        %v1185 = vunpack.c.l.b16 %v1165
        %v1186 = vunpack.c.l.b16 %v1166
        %v1187 = vunpack.c.l.b16 %v1167
        %v1188 = vpack.c.b16 %v1181, %v1180
        %v1189 = vpack.c.b16 %v1183, %v1182
        %v1190 = vpack.c.b16 %v1185, %v1184
        %v1191 = vpack.c.b16 %v1187, %v1186
        %v1197 = vsel %vm585, %v1171, 0
        %1199 = vmatpush.bf16.msra.mxu0 0
        %1200 = vmatpush.bf16.msra.mxu0 0
        %1201 = vmatpush.bf16.msra.mxu0 0
        %1202 = vmatpush.bf16.msra.mxu0 0
        %1203 = vmatpush.bf16.msra.mxu0 %v1191
        %1204 = vmatpush.bf16.msra.mxu0 %v1190
        %1205 = vmatpush.bf16.msra.mxu0 %v1189
        %1206 = vmatpush.bf16.msra.mxu0 %v1188
        %1207 = vmatmul.bf16.gmra.mxu0 %v1197
        %v1208 = vpop.f32.mrf.mxu0
        %v1209 = vadd.f32 %v1168, %v1208
        %v1210 = vpop.f32.mrf.mxu0
        %1211 = vdwg.mxu0
        %v1212 = vld [vmem:[%s9] sm:$0x1]
        %v1213 = vld [vmem:[%s10] sm:$0x1]
        %vm1214 = vcmask 516096
        %v1215 = vsel %vm1214, %v1209, 0.0
        %1216 = vadd.xlane.f32.xlu0 %v1215
        %v1217 = vpop.xlane.xlu0 %1216
        %v1218 = vmul.f32 %v1217, %v605
        %v1219 = vsub.f32 %v1209, %v1218
        %v1220 = vmul.f32 %v1219, %v1219
        %v1221 = vsel %vm1214, %v1220, 0.0
        %1222 = vadd.xlane.f32.xlu0 %v1221
        %v1223 = vpop.xlane.xlu0 %1222
        %v1224 = vmul.f32 %v1223, %v605
        %v1225 = vadd.f32 %v1224, 1e-05
        %v1226 = vrsqrt.pop %v1225
        %v1227 = vmul.f32 %v1226, %v1225
        %v1228 = vmul.f32 %v1227, %v1226
        %v1229 = vmul.f32 0.5, %v1228
        %v1230 = vsub.f32 1.5, %v1229
        %v1231 = vmul.f32 %v1226, %v1230
        %vm1232 = vweird.f32 %v1225
        %vm1233 = vweird.f32 %v1226
        %vm1234 = vmor %vm1232, %vm1233
        %v1235 = vsel %vm1234, %v1226, %v1231
        %v1236 = vmul.f32 %v1219, %v1235
        %v1237 = vmul.f32 %v1236, %v1212
        %v1238 = vadd.f32 %v1237, %v1213
        %v1239 = vpack.c.bf16 %v1238, %v1238
        %v1240 = vld [vmem:[%s11] sm:$0xff]
        %v1241 = vld [vmem:[%s11 + $0x8] sm:$0xff]
        %v1242 = vld [vmem:[%s11 + $0x10] sm:$0xff]
        %v1243 = vld [vmem:[%s11 + $0x18] sm:$0xff]
        %v1244 = vld [vmem:[%s11 + $0x20] sm:$0xff]
        %v1245 = vld [vmem:[%s11 + $0x28] sm:$0xff]
        %v1246 = vld [vmem:[%s11 + $0x30] sm:$0xff]
        %v1247 = vld [vmem:[%s11 + $0x38] sm:$0xff]
        %v1248 = vld [vmem:[%s12] sm:$0x3]
        %v1257 = vunpack.c.l.b16 %v1240
        %v1258 = vunpack.c.h.b16 %v1240
        %v1259 = vunpack.c.l.b16 %v1241
        %v1260 = vunpack.c.h.b16 %v1241
        %v1261 = vunpack.c.l.b16 %v1242
        %v1262 = vunpack.c.h.b16 %v1242
        %v1263 = vunpack.c.l.b16 %v1243
        %v1264 = vunpack.c.h.b16 %v1243
        %v1265 = vunpack.c.l.b16 %v1244
        %v1266 = vunpack.c.h.b16 %v1244
        %v1267 = vunpack.c.l.b16 %v1245
        %v1268 = vunpack.c.h.b16 %v1245
        %v1269 = vunpack.c.l.b16 %v1246
        %v1270 = vunpack.c.h.b16 %v1246
        %v1271 = vunpack.c.l.b16 %v1247
        %v1272 = vunpack.c.h.b16 %v1247
        %v1273 = vpack.c.b16 %v1259, %v1257
        %v1274 = vpack.c.b16 %v1260, %v1258
        %v1275 = vpack.c.b16 %v1263, %v1261
        %v1276 = vpack.c.b16 %v1264, %v1262
        %v1277 = vpack.c.b16 %v1267, %v1265
        %v1278 = vpack.c.b16 %v1268, %v1266
        %v1279 = vpack.c.b16 %v1271, %v1269
        %v1280 = vpack.c.b16 %v1272, %v1270
        %v1290 = vperm.slane %v1248, 0
        %v1291 = vperm.slane %v1248, 1
        %v1295 = vsel %vm585, %v1239, 0
        %1297 = vmatpush.bf16.msra.mxu0 0
        %1298 = vmatpush.bf16.msra.mxu0 0
        %1299 = vmatpush.bf16.msra.mxu0 0
        %1300 = vmatpush.bf16.msra.mxu0 0
        %1301 = vmatpush.bf16.msra.mxu0 %v1279
        %1302 = vmatpush.bf16.msra.mxu0 %v1277
        %1303 = vmatpush.bf16.msra.mxu0 %v1275
        %1304 = vmatpush.bf16.msra.mxu0 %v1273
        %1305 = vmatmul.bf16.gmra.mxu0 %v1295
        %v1306 = vpop.f32.mrf.mxu0
        %v1307 = vadd.f32 %v1290, %v1306
        %v1308 = vpop.f32.mrf.mxu0
        %1309 = vdwg.mxu0
        %1310 = vmatpush.bf16.msra.mxu0 0
        %1311 = vmatpush.bf16.msra.mxu0 0
        %1312 = vmatpush.bf16.msra.mxu0 0
        %1313 = vmatpush.bf16.msra.mxu0 0
        %1314 = vmatpush.bf16.msra.mxu0 %v1280
        %1315 = vmatpush.bf16.msra.mxu0 %v1278
        %1316 = vmatpush.bf16.msra.mxu0 %v1276
        %1317 = vmatpush.bf16.msra.mxu0 %v1274
        %1318 = vmatmul.bf16.gmra.mxu0 %v1295
        %v1319 = vpop.f32.mrf.mxu0
        %v1320 = vadd.f32 %v1291, %v1319
        %v1321 = vpop.f32.mrf.mxu0
        %1322 = vdwg.mxu0
        %v1323 = vmax.f32 %v1307, 0.0
        %v1324 = vmax.f32 %v1320, 0.0
        %v1325 = vpack.c.bf16 %v1323, %v1323
        %v1326 = vpack.c.bf16 %v1324, %v1324
        %v1327 = vld [vmem:[%s13] sm:$0xf]
        %v1328 = vld [vmem:[%s13 + $0x4] sm:$0xf]
        %v1329 = vld [vmem:[%s13 + $0x8] sm:$0xf]
        %v1330 = vld [vmem:[%s13 + $0xc] sm:$0xf]
        %v1331 = vld [vmem:[%s13 + $0x10] sm:$0xf]
        %v1332 = vld [vmem:[%s13 + $0x14] sm:$0xf]
        %v1333 = vld [vmem:[%s13 + $0x18] sm:$0xf]
        %v1334 = vld [vmem:[%s13 + $0x1c] sm:$0xf]
        %v1335 = vld [vmem:[%s13 + $0x20] sm:$0xf]
        %v1336 = vld [vmem:[%s13 + $0x24] sm:$0xf]
        %v1337 = vld [vmem:[%s13 + $0x28] sm:$0xf]
        %v1338 = vld [vmem:[%s13 + $0x2c] sm:$0xf]
        %v1339 = vld [vmem:[%s13 + $0x30] sm:$0xf]
        %v1340 = vld [vmem:[%s13 + $0x34] sm:$0xf]
        %v1341 = vld [vmem:[%s13 + $0x38] sm:$0xf]
        %v1342 = vld [vmem:[%s13 + $0x3c] sm:$0xf]
        %v1343 = vld [vmem:[%s13 + $0x40] sm:$0xf]
        %v1344 = vld [vmem:[%s13 + $0x44] sm:$0xf]
        %v1345 = vld [vmem:[%s13 + $0x48] sm:$0xf]
        %v1346 = vld [vmem:[%s13 + $0x4c] sm:$0xf]
        %v1347 = vld [vmem:[%s13 + $0x50] sm:$0xf]
        %v1348 = vld [vmem:[%s13 + $0x54] sm:$0xf]
        %v1349 = vld [vmem:[%s13 + $0x58] sm:$0xf]
        %v1350 = vld [vmem:[%s13 + $0x5c] sm:$0xf]
        %v1351 = vld [vmem:[%s13 + $0x60] sm:$0xf]
        %v1352 = vld [vmem:[%s13 + $0x64] sm:$0xf]
        %v1353 = vld [vmem:[%s13 + $0x68] sm:$0xf]
        %v1354 = vld [vmem:[%s13 + $0x6c] sm:$0xf]
        %v1355 = vld [vmem:[%s13 + $0x70] sm:$0xf]
        %v1356 = vld [vmem:[%s13 + $0x74] sm:$0xf]
        %v1357 = vld [vmem:[%s13 + $0x78] sm:$0xf]
        %v1358 = vld [vmem:[%s13 + $0x7c] sm:$0xf]
        %v1359 = vld [vmem:[%s14] sm:$0x1]
        %v1392 = vunpack.c.l.b16 %v1327
        %v1393 = vunpack.c.l.b16 %v1328
        %v1394 = vunpack.c.l.b16 %v1329
        %v1395 = vunpack.c.l.b16 %v1330
        %v1396 = vunpack.c.l.b16 %v1331
        %v1397 = vunpack.c.l.b16 %v1332
        %v1398 = vunpack.c.l.b16 %v1333
        %v1399 = vunpack.c.l.b16 %v1334
        %v1400 = vunpack.c.l.b16 %v1335
        %v1401 = vunpack.c.l.b16 %v1336
        %v1402 = vunpack.c.l.b16 %v1337
        %v1403 = vunpack.c.l.b16 %v1338
        %v1404 = vunpack.c.l.b16 %v1339
        %v1405 = vunpack.c.l.b16 %v1340
        %v1406 = vunpack.c.l.b16 %v1341
        %v1407 = vunpack.c.l.b16 %v1342
        %v1408 = vunpack.c.l.b16 %v1343
        %v1409 = vunpack.c.l.b16 %v1344
        %v1410 = vunpack.c.l.b16 %v1345
        %v1411 = vunpack.c.l.b16 %v1346
        %v1412 = vunpack.c.l.b16 %v1347
        %v1413 = vunpack.c.l.b16 %v1348
        %v1414 = vunpack.c.l.b16 %v1349
        %v1415 = vunpack.c.l.b16 %v1350
        %v1416 = vunpack.c.l.b16 %v1351
        %v1417 = vunpack.c.l.b16 %v1352
        %v1418 = vunpack.c.l.b16 %v1353
        %v1419 = vunpack.c.l.b16 %v1354
        %v1420 = vunpack.c.l.b16 %v1355
        %v1421 = vunpack.c.l.b16 %v1356
        %v1422 = vunpack.c.l.b16 %v1357
        %v1423 = vunpack.c.l.b16 %v1358
        %v1424 = vpack.c.b16 %v1393, %v1392
        %v1425 = vpack.c.b16 %v1395, %v1394
        %v1426 = vpack.c.b16 %v1397, %v1396
        %v1427 = vpack.c.b16 %v1399, %v1398
        %v1428 = vpack.c.b16 %v1401, %v1400
        %v1429 = vpack.c.b16 %v1403, %v1402
        %v1430 = vpack.c.b16 %v1405, %v1404
        %v1431 = vpack.c.b16 %v1407, %v1406
        %v1432 = vpack.c.b16 %v1409, %v1408
        %v1433 = vpack.c.b16 %v1411, %v1410
        %v1434 = vpack.c.b16 %v1413, %v1412
        %v1435 = vpack.c.b16 %v1415, %v1414
        %v1436 = vpack.c.b16 %v1417, %v1416
        %v1437 = vpack.c.b16 %v1419, %v1418
        %v1438 = vpack.c.b16 %v1421, %v1420
        %v1439 = vpack.c.b16 %v1423, %v1422
        %1456 = vmatpush.bf16.msra.mxu0 %v1431
        %1457 = vmatpush.bf16.msra.mxu0 %v1430
        %1458 = vmatpush.bf16.msra.mxu0 %v1429
        %1459 = vmatpush.bf16.msra.mxu0 %v1428
        %1460 = vmatpush.bf16.msra.mxu0 %v1427
        %1461 = vmatpush.bf16.msra.mxu0 %v1426
        %1462 = vmatpush.bf16.msra.mxu0 %v1425
        %1463 = vmatpush.bf16.msra.mxu0 %v1424
        %1464 = vmatmul.bf16.gmra.mxu0 %v1325
        %v1465 = vpop.f32.mrf.mxu0
        %v1466 = vadd.f32 %v1359, %v1465
        %v1467 = vpop.f32.mrf.mxu0
        %1468 = vdwg.mxu0
        %1469 = vmatpush.bf16.msra.mxu0 %v1439
        %1470 = vmatpush.bf16.msra.mxu0 %v1438
        %1471 = vmatpush.bf16.msra.mxu0 %v1437
        %1472 = vmatpush.bf16.msra.mxu0 %v1436
        %1473 = vmatpush.bf16.msra.mxu0 %v1435
        %1474 = vmatpush.bf16.msra.mxu0 %v1434
        %1475 = vmatpush.bf16.msra.mxu0 %v1433
        %1476 = vmatpush.bf16.msra.mxu0 %v1432
        %1477 = vmatmul.bf16.gmra.mxu0 %v1326
        %v1478 = vpop.f32.mrf.mxu0
        %v1479 = vadd.f32 %v1466, %v1478
        %v1480 = vpop.f32.mrf.mxu0
        %1481 = vdwg.mxu0
        %v1482 = vadd.f32 %v1209, %v1479
        %v1483 = vld [vmem:[%s15] sm:$0xff]
        %v1484 = vld [vmem:[%s15 + $0x8] sm:$0xff]
        %v1485 = vld [vmem:[%s15 + $0x10] sm:$0xff]
        %v1486 = vld [vmem:[%s15 + $0x18] sm:$0xff]
        %v1487 = vld [vmem:[%s15 + $0x20] sm:$0xff]
        %v1488 = vld [vmem:[%s15 + $0x28] sm:$0xff]
        %v1489 = vld [vmem:[%s15 + $0x30] sm:$0xff]
        %v1490 = vld [vmem:[%s15 + $0x38] sm:$0xff]
        %v1491 = vld [vmem:[%s16] sm:$0x1]
        %v1493 = vsel %vm585, %v1482, 0
        %1495 = vmatpush.msra.mxu0 0.0
        %1496 = vmatpush.msra.mxu0 0.0
        %1497 = vmatpush.msra.mxu0 0.0
        %1498 = vmatpush.msra.mxu0 0.0
        %1499 = vmatpush.msra.mxu0 0.0
        %1500 = vmatpush.msra.mxu0 0.0
        %1501 = vmatpush.msra.mxu0 0.0
        %1502 = vmatpush.msra.mxu0 0.0
        %1503 = vmatpush.msra.mxu0 %v1490
        %1504 = vmatpush.msra.mxu0 %v1489
        %1505 = vmatpush.msra.mxu0 %v1488
        %1506 = vmatpush.msra.mxu0 %v1487
        %1507 = vmatpush.msra.mxu0 %v1486
        %1508 = vmatpush.msra.mxu0 %v1485
        %1509 = vmatpush.msra.mxu0 %v1484
        %1510 = vmatpush.msra.mxu0 %v1483
        %1511 = vmatmul.f32.gmra.mxu0 %v1493
        %v1512 = vpop.f32.mrf.mxu0
        %v1513 = vadd.f32 %v1491, %v1512
        %1514 = vdwg.mxu0
        %vm1515 = vcmask 16384
        %1516 = vst.msk [vmem:[%s555] sm:$0x1] %vm1515, %v1513
        %s1517 = sand.u32 %s406, 1
        %s1518 = scalar_lea.sflag [#allocation3], %s1517
        %s1519 = sand.u32 %s406, 1
        %s1520 = scalar_lea.vmem [#allocation2], %s1519
        // Predicated region
        $region89: #{fast_weight_cde_v3_forward.1} parent=87 // pred_check
          %p1521 = pneg %p416
        $region90: #{fast_weight_cde_v3_forward.1} parent=87 // pred_check_branch
          %1523 = sbr.rel (%p1521) target = $region92
        $region91: #{fast_weight_cde_v3_forward.1} parent=87 // pred_region
          %1525 = vsyncadd %s1518, 0
          %s1526 = scalar_lea.hbm %s17, %s31
          %s1528 = sshll.u32 %s1520, 4
          %s1529 = int_to_ptr.vmem [resolvable:$true] %s1528
          %s1530 = sshll.u32 %s1526, 4
          %s1531 = int_to_ptr.hbm [resolvable:$true] %s1530
          %1533 = dma.vmem_to_hbm [thread:$0]  %s1529, 16, %s1531, %s1518
        $region92: #{fast_weight_cde_v3_forward.1} parent=87 // pred_fallthru
          _
      $region88: #{fast_weight_cde_v3_forward.1} parent=5 // pred_fallthru
        _
      %p1534 = scmp.le.s32.totalorder 2, %s26
      // Predicated region
      $region93: #{fast_weight_cde_v3_forward.1} parent=5 // pred_check
        %p1535 = pneg %p1534
      $region94: #{fast_weight_cde_v3_forward.1} parent=5 // pred_check_branch
        %1537 = sbr.rel (%p1535) target = $region96
      $region95: #{fast_weight_cde_v3_forward.1} parent=5 // pred_region
        %s1538 = ssub.s32 %s26, 2
        // Predicated region
        $region97: #{fast_weight_cde_v3_forward.1} parent=95 // pred_check
          %p1539 = pneg %p422
        $region98: #{fast_weight_cde_v3_forward.1} parent=95 // pred_check_branch
          %1541 = sbr.rel (%p1539) target = $region100
        $region99: #{fast_weight_cde_v3_forward.1} parent=95 // pred_region
          %s1542 = sand.u32 %s407, 1
          %s1543 = scalar_lea.sflag [#allocation3], %s1542
          %s1544 = sand.u32 %s407, 1
          %s1545 = scalar_lea.vmem [#allocation2], %s1544
          %1547 = dma.done %s1543, 16
        $region100: #{fast_weight_cde_v3_forward.1} parent=95 // pred_fallthru
          _
      $region96: #{fast_weight_cde_v3_forward.1} parent=5 // pred_fallthru
        _
    $region6: #{fast_weight_cde_v3_forward.1} parent=1 // loop_footer
      %s30 = sadd.s32 1, %s26
    $region7: #{fast_weight_cde_v3_forward.1} parent=1 // loop_footer_branch
      %25 = sbr.rel target = $region3
    $region8: #{fast_weight_cde_v3_forward.1} parent=1 // loop_exit
      _
    %1548 = vsyncpa [#allocation3], 1
    %s1549 = scalar_lea.sflag [#allocation3], 1
    %1550 = vsyncpa %s1549, 1

</llo_original>
